<compile_context>
chip_gen: v7x
topology: tpu7x:2x2x1
jax: 0.10.0
libtpu: 0.0.40
codegen_flags: <defaults>
</compile_context>

<pallas_src>
import functools

import jax
import jax.numpy as jnp
from jax.experimental import pallas as pl
from jax.experimental.pallas import tpu as pltpu


def _round_up(x, m):
    return ((x + m - 1) // m) * m


def _row_masks(tile_m, seq_len, rows_valid, mask_pad):
    """Per-row sequence-boundary and validity masks for the current tile."""
    row0 = pl.program_id(0) * tile_m
    ridx = row0 + jax.lax.broadcasted_iota(jnp.int32, (tile_m, 1), 0)   # global rows
    lpos = ridx % seq_len
    is_start = lpos == 0                      # l == 0     -> mask the x[l-1] tap
    is_end = lpos == (seq_len - 1)            # l == L-1   -> mask the x[l+1] tap
    valid = (ridx < rows_valid) if mask_pad else None
    return is_start, is_end, valid


def _conv3(y, prev_row, next_row, w_ref, is_start, is_end):
    """Conv1d(k=3, pad=1) on a row tile as 3 accumulated bf16 MXU matmuls.

    y: (T, Cp) f32; prev_row/next_row: (1, Cp) f32 halo rows; w_ref: (3, Cp, Cp) bf16.
    """
    y_m1 = jnp.where(is_start, 0.0, jnp.concatenate([prev_row, y[:-1, :]], axis=0))
    y_p1 = jnp.where(is_end, 0.0, jnp.concatenate([y[1:, :], next_row], axis=0))
    out = jnp.dot(y_m1.astype(jnp.bfloat16), w_ref[0],
                  preferred_element_type=jnp.float32)
    out = out + jnp.dot(y.astype(jnp.bfloat16), w_ref[1],
                        preferred_element_type=jnp.float32)
    out = out + jnp.dot(y_p1.astype(jnp.bfloat16), w_ref[2],
                        preferred_element_type=jnp.float32)
    return out


def _store_and_stats(h, h_ref, st_ref):
    """Store bf16 conv output + emit per-channel sum / sumsq for this tile."""
    hq = h.astype(jnp.bfloat16)
    h_ref[...] = hq
    hs = hq.astype(jnp.float32)               # stats consistent with stored values
    ssum = jnp.sum(hs, axis=0, keepdims=True)
    ssq = jnp.sum(hs * hs, axis=0, keepdims=True)
    pad = jnp.zeros((6, hs.shape[1]), jnp.float32)
    st_ref[...] = jnp.concatenate([ssum, ssq, pad], axis=0)


def _pass1_kernel(x_ref, xp_ref, xn_ref, w_ref, h_ref, st_ref, *,
                  tile_m, seq_len, rows_valid, mask_pad):
    is_start, is_end, valid = _row_masks(tile_m, seq_len, rows_valid, mask_pad)
    x = x_ref[...]
    h = _conv3(x, xp_ref[7:8, :], xn_ref[0:1, :], w_ref, is_start, is_end)
    if mask_pad:
        h = jnp.where(valid, h, 0.0)          # keep padded rows out of the stats
    _store_and_stats(h, h_ref, st_ref)


def _pass2_kernel(h1_ref, hp_ref, hn_ref, p_ref, w_ref, h2_ref, st_ref, *,
                  tile_m, seq_len, rows_valid, mask_pad):
    is_start, is_end, valid = _row_masks(tile_m, seq_len, rows_valid, mask_pad)
    scale = p_ref[0:1, :]                     # folded BN1 scale   (1, Cp) f32
    offset = p_ref[1:2, :]                    # folded BN1 offset  (1, Cp) f32

    def bn_relu(v):                           # per-channel affine + relu, exact per row
        return jnp.maximum(v.astype(jnp.float32) * scale + offset, 0.0)

    a = bn_relu(h1_ref[...])
    if mask_pad:
        a = jnp.where(valid, a, 0.0)          # padded rows of relu(bn1(0)) != 0
    ap = bn_relu(hp_ref[7:8, :])
    an = bn_relu(hn_ref[0:1, :])
    h = _conv3(a, ap, an, w_ref, is_start, is_end)
    if mask_pad:
        h = jnp.where(valid, h, 0.0)
    _store_and_stats(h, h2_ref, st_ref)


def _pass3_kernel(h2_ref, p_ref, x_ref, o_ref):
    scale = p_ref[0:1, :]
    offset = p_ref[1:2, :]
    y = h2_ref[...].astype(jnp.float32) * scale + offset + x_ref[...]
    o_ref[...] = jnp.maximum(y, 0.0)


@jax.jit
def basic_block_forward(x_ncl, w1, g1, b1, w2, g2, b2, eps=1e-5):
    """x_ncl: (N, C, L) f32, PyTorch NCL. w*: (3, Cin, Cout). g*/b*: (1, C)."""
    n, c, l = x_ncl.shape
    cp = _round_up(c, 128)
    rows = n * l
    tile_m = min(512, _round_up(rows, 8))
    rows_pad = _round_up(rows, tile_m)
    grid = rows_pad // tile_m
    t8 = tile_m // 8
    b8 = rows_pad // 8
    mask_pad = rows_pad != rows

    # NCL -> flattened channels-last (rows_pad, Cp); transpose/reshape/pad fuse under jit.
    x_flat = jnp.transpose(x_ncl, (0, 2, 1)).reshape(rows, c)
    x_flat = jnp.pad(x_flat, ((0, rows_pad - rows), (0, cp - c)))

    def pack_w(w):      # (3, Cin, Cout) -> (3, Cp, Cp) bf16 (zero-padded channels)
        return jnp.pad(w, ((0, 0), (0, cp - c), (0, cp - c))).astype(jnp.bfloat16)

    def pack_v(v):      # (1, C) -> (Cp,) f32, padded channels stay exactly zero
        return jnp.pad(v.reshape(-1), (0, cp - c))

    w1b, w2b = pack_w(w1), pack_w(w2)
    g1p, b1p, g2p, b2p = pack_v(g1), pack_v(b1), pack_v(g2), pack_v(b2)

    center = pl.BlockSpec((tile_m, cp), lambda i: (i, 0))
    prev8 = pl.BlockSpec((8, cp), lambda i: (jnp.maximum(i * t8 - 1, 0), 0))
    next8 = pl.BlockSpec((8, cp), lambda i: (jnp.minimum((i + 1) * t8, b8 - 1), 0))
    wspec = pl.BlockSpec((3, cp, cp), lambda i: (0, 0, 0))     # resident weights
    pspec = pl.BlockSpec((8, cp), lambda i: (0, 0))            # resident BN params
    stats_spec = pl.BlockSpec((8, cp), lambda i: (i, 0))       # distinct block per tile

    # Well under v7x's 64 MiB physical VMEM; above the defaults when tiles are big.
    vmem_bytes = int(min(48 * 1024 * 1024,
                         max(16 * 1024 * 1024,
                             20 * tile_m * cp * 4 + 16 * cp * cp * 2)))
    cparams = pltpu.CompilerParams(dimension_semantics=("parallel",),
                                   vmem_limit_bytes=vmem_bytes)

    conv_flops = 2 * rows_pad * (3 * cp) * cp
    conv_bytes = rows_pad * cp * (4 + 2) + 3 * cp * cp * 2 + grid * 8 * cp * 4

    # ---- pass 1: conv1 + per-tile BN1 stats --------------------------------
    kern1 = functools.partial(_pass1_kernel, tile_m=tile_m, seq_len=l,
                              rows_valid=rows, mask_pad=mask_pad)
    h1, st1 = pl.pallas_call(
        kern1,
        grid=(grid,),
        in_specs=[center, prev8, next8, wspec],
        out_specs=(center, stats_spec),
        out_shape=(jax.ShapeDtypeStruct((rows_pad, cp), jnp.bfloat16),
                   jax.ShapeDtypeStruct((grid * 8, cp), jnp.float32)),
        compiler_params=cparams,
        cost_estimate=pl.CostEstimate(flops=conv_flops, transcendentals=0,
                                      bytes_accessed=conv_bytes),
    )(x_flat, x_flat, x_flat, w1b)

    def fold_bn(st, gamma, beta):
        # Tiny reduction + fold: biased batch variance via E[y^2] - mean^2.
        s = st.reshape(grid, 8, cp).sum(axis=0)
        mean = s[0] / rows
        var = jnp.maximum(s[1] / rows - mean * mean, 0.0)
        scale = gamma * jax.lax.rsqrt(var + eps)
        offset = beta - mean * scale
        return jnp.concatenate(
            [scale[None], offset[None], jnp.zeros((6, cp), jnp.float32)], axis=0)

    p1 = fold_bn(st1, g1p, b1p)

    # ---- pass 2: BN1 + relu + conv2 + per-tile BN2 stats -------------------
    kern2 = functools.partial(_pass2_kernel, tile_m=tile_m, seq_len=l,
                              rows_valid=rows, mask_pad=mask_pad)
    h2, st2 = pl.pallas_call(
        kern2,
        grid=(grid,),
        in_specs=[center, prev8, next8, pspec, wspec],
        out_specs=(center, stats_spec),
        out_shape=(jax.ShapeDtypeStruct((rows_pad, cp), jnp.bfloat16),
                   jax.ShapeDtypeStruct((grid * 8, cp), jnp.float32)),
        compiler_params=cparams,
        cost_estimate=pl.CostEstimate(flops=conv_flops + 4 * rows_pad * cp,
                                      transcendentals=0,
                                      bytes_accessed=conv_bytes),
    )(h1, h1, h1, p1, w2b)

    p2 = fold_bn(st2, g2p, b2p)

    # ---- pass 3: BN2 + residual + relu --------------------------------------
    out_flat = pl.pallas_call(
        _pass3_kernel,
        grid=(grid,),
        in_specs=[center, pspec, center],
        out_specs=center,
        out_shape=jax.ShapeDtypeStruct((rows_pad, cp), jnp.float32),
        compiler_params=cparams,
        cost_estimate=pl.CostEstimate(flops=4 * rows_pad * cp, transcendentals=0,
                                      bytes_accessed=rows_pad * cp * 10),
    )(h2, p2, x_flat)

    out = out_flat[:rows, :c].reshape(n, l, c)
    return jnp.transpose(out, (0, 2, 1))                  # back to (N, C, L)


def _reference_forward(x_ncl, w1, g1, b1, w2, g2, b2, eps=1e-5):
    """Pure-JAX f32 reference with lax.conv (matches PyTorch semantics)."""
    def conv(x, w):  # w: (3, Cin, Cout) -> torch layout (Cout, Cin, 3)
        rhs = jnp.transpose(w, (2, 1, 0))
        return jax.lax.conv_general_dilated(
            x, rhs, window_strides=(1,), padding=[(1, 1)],
            dimension_numbers=("NCH", "OIH", "NCH"))

    def bn(y, g, b):
        m = jnp.mean(y, axis=(0, 2), keepdims=True)
        v = jnp.mean(jnp.square(y - m), axis=(0, 2), keepdims=True)
        return (y - m) / jnp.sqrt(v + eps) * g.reshape(1, -1, 1) + b.reshape(1, -1, 1)

    h = jax.nn.relu(bn(conv(x_ncl, w1), g1, b1))
    h = bn(conv(h, w2), g2, b2)
    return jax.nn.relu(h + x_ncl)


if __name__ == "__main__":
    # in_channels == out_channels so the residual add is valid with downsample=None.
    N, C, L = 2, 8, 16

    key = jax.random.PRNGKey(0)
    k_x, k_w1, k_w2, k_g1, k_b1, k_g2, k_b2 = jax.random.split(key, 7)

    x = jax.random.normal(k_x, (N, C, L), dtype=jnp.float32)

    fan_in = 3 * C
    w1 = jax.random.normal(k_w1, (3, C, C), dtype=jnp.float32) / jnp.sqrt(fan_in)
    w2 = jax.random.normal(k_w2, (3, C, C), dtype=jnp.float32) / jnp.sqrt(fan_in)
    g1 = 1.0 + 0.1 * jax.random.normal(k_g1, (1, C), dtype=jnp.float32)
    b1 = 0.1 * jax.random.normal(k_b1, (1, C), dtype=jnp.float32)
    g2 = 1.0 + 0.1 * jax.random.normal(k_g2, (1, C), dtype=jnp.float32)
    b2 = 0.1 * jax.random.normal(k_b2, (1, C), dtype=jnp.float32)

    out = jax.block_until_ready(basic_block_forward(x, w1, g1, b1, w2, g2, b2))
    ref = _reference_forward(x, w1, g1, b1, w2, g2, b2)

    assert out.shape == (N, C, L)
    err = float(jnp.max(jnp.abs(out - ref)))
    # bf16 MXU operands (f32 accumulation / BN / residual) -> loosened tolerance
    # vs the pure-f32 reference; real logic bugs show up as O(1) errors.
    assert err < 1e-1, f"Pallas kernel disagrees with reference (max abs err {err})"
    print("KERNEL_OK")
</pallas_src>

<mosaic_0001>
module attributes {stable_mosaic.version = 11 : i64} {
  func.func @_pass1_kernel(%arg0: i32, %arg1: memref<32x128xf32, #tpu.memory_space<vmem>>, %arg2: memref<8x128xf32, #tpu.memory_space<vmem>>, %arg3: memref<8x128xf32, #tpu.memory_space<vmem>>, %arg4: memref<3x128x128xbf16, #tpu.memory_space<vmem>>, %arg5: memref<32x128xbf16, #tpu.memory_space<vmem>>, %arg6: memref<8x128xf32, #tpu.memory_space<vmem>>) attributes {dimension_semantics = [#tpu.dimension_semantics<parallel>], iteration_bounds = array<i64: 1>, scalar_prefetch = 0 : i64, scratch_operands = 0 : i64, tpu.core_type = #tpu.core_type<tc>, window_params = [{transform_indices = @transform_0, window_bounds = array<i64: 32, 128>}, {transform_indices = @transform_1, window_bounds = array<i64: 8, 128>}, {transform_indices = @transform_2, window_bounds = array<i64: 8, 128>}, {pipeline_mode = #tpu.pipeline_mode<synchronous>, transform_indices = @transform_3, window_bounds = array<i64: 3, 128, 128>}, {transform_indices = @transform_4, window_bounds = array<i64: 32, 128>}, {transform_indices = @transform_5, window_bounds = array<i64: 8, 128>}]} {
    %c32_i32 = arith.constant 32 : i32
    %0 = arith.muli %arg0, %c32_i32 : i32
    %1 = tpu.iota {dimensions = array<i32: 0>} : vector<32x1xi32>
    %2 = vector.broadcast %0 : i32 to vector<32x1xi32>
    %3 = arith.addi %2, %1 : vector<32x1xi32>
    %c16_i32 = arith.constant 16 : i32
    %c0_i32 = arith.constant 0 : i32
    %4 = arith.cmpi eq, %c16_i32, %c0_i32 : i32
    %c1_i32 = arith.constant 1 : i32
    %5 = arith.select %4, %c1_i32, %c16_i32 : i32
    %6 = vector.broadcast %5 : i32 to vector<32x1xi32>
    %7 = arith.remsi %3, %6 : vector<32x1xi32>
    %c0_i32_0 = arith.constant 0 : i32
    %8 = vector.broadcast %c0_i32_0 : i32 to vector<32x1xi32>
    %9 = arith.cmpi ne, %7, %8 : vector<32x1xi32>
    %c0_i32_1 = arith.constant 0 : i32
    %10 = vector.broadcast %c0_i32_1 : i32 to vector<32x1xi32>
    %11 = arith.cmpi slt, %7, %10 : vector<32x1xi32>
    %c0_i32_2 = arith.constant 0 : i32
    %12 = arith.cmpi slt, %5, %c0_i32_2 : i32
    %13 = vector.broadcast %12 : i1 to vector<32x1xi1>
    %14 = vector.broadcast %13 : vector<32x1xi1> to vector<32x1xi1>
    %15 = arith.xori %11, %14 : vector<32x1xi1>
    %16 = arith.andi %15, %9 : vector<32x1xi1>
    %17 = vector.broadcast %5 : i32 to vector<32x1xi32>
    %18 = arith.addi %7, %17 : vector<32x1xi32>
    %19 = arith.select %16, %18, %7 : vector<32x1xi1>, vector<32x1xi32>
    %c0_i32_3 = arith.constant 0 : i32
    %20 = vector.broadcast %c0_i32_3 : i32 to vector<32x1xi32>
    %21 = arith.cmpi eq, %19, %20 : vector<32x1xi32>
    %c15_i32 = arith.constant 15 : i32
    %22 = vector.broadcast %c15_i32 : i32 to vector<32x1xi32>
    %23 = arith.cmpi eq, %19, %22 : vector<32x1xi32>
    %c0 = arith.constant 0 : index
    %c0_4 = arith.constant 0 : index
    %24 = vector.load %arg1[%c0, %c0_4] : memref<32x128xf32, #tpu.memory_space<vmem>>, vector<32x128xf32>
    %c7 = arith.constant 7 : index
    %c0_5 = arith.constant 0 : index
    %25 = vector.load %arg2[%c7, %c0_5] : memref<8x128xf32, #tpu.memory_space<vmem>>, vector<1x128xf32>
    %c0_6 = arith.constant 0 : index
    %c0_7 = arith.constant 0 : index
    %26 = vector.load %arg3[%c0_6, %c0_7] : memref<8x128xf32, #tpu.memory_space<vmem>>, vector<1x128xf32>
    %27 = vector.extract_strided_slice %24 {offsets = [0, 0], sizes = [31, 128], strides = [1, 1]} : vector<32x128xf32> to vector<31x128xf32>
    %28 = tpu.concatenate %25, %27 in 0 : vector<1x128xf32>, vector<31x128xf32> -> vector<32x128xf32>
    %cst = arith.constant 0.000000e+00 : f32
    %29 = vector.shape_cast %21 : vector<32x1xi1> to vector<32x1xi1>
    %30 = vector.broadcast %29 : vector<32x1xi1> to vector<32x128xi1>
    %31 = vector.broadcast %cst : f32 to vector<32x128xf32>
    %32 = arith.select %30, %31, %28 : vector<32x128xi1>, vector<32x128xf32>
    %33 = vector.extract_strided_slice %24 {offsets = [1, 0], sizes = [31, 128], strides = [1, 1]} : vector<32x128xf32> to vector<31x128xf32>
    %34 = tpu.concatenate %33, %26 in 0 : vector<31x128xf32>, vector<1x128xf32> -> vector<32x128xf32>
    %cst_8 = arith.constant 0.000000e+00 : f32
    %35 = vector.shape_cast %23 : vector<32x1xi1> to vector<32x1xi1>
    %36 = vector.broadcast %35 : vector<32x1xi1> to vector<32x128xi1>
    %37 = vector.broadcast %cst_8 : f32 to vector<32x128xf32>
    %38 = arith.select %36, %37, %34 : vector<32x128xi1>, vector<32x128xf32>
    %39 = arith.truncf %32 : vector<32x128xf32> to vector<32x128xbf16>
    %c0_9 = arith.constant 0 : index
    %c0_10 = arith.constant 0 : index
    %c0_11 = arith.constant 0 : index
    %40 = vector.load %arg4[%c0_9, %c0_10, %c0_11] : memref<3x128x128xbf16, #tpu.memory_space<vmem>>, vector<1x128x128xbf16>
    %41 = vector.shape_cast %40 : vector<1x128x128xbf16> to vector<128x128xbf16>
    %cst_12 = arith.constant dense<0.000000e+00> : vector<32x128xf32>
    %42 = tpu.matmul %39, %41, %cst_12 {dimension_numbers = #tpu.dot_dimension_numbers<[1], [0], [0], [1], [0, 0, 1, 1], [], []>} : vector<32x128xbf16>, vector<128x128xbf16>, vector<32x128xf32> -> vector<32x128xf32>
    %43 = arith.truncf %24 : vector<32x128xf32> to vector<32x128xbf16>
    %c1 = arith.constant 1 : index
    %c0_13 = arith.constant 0 : index
    %c0_14 = arith.constant 0 : index
    %44 = vector.load %arg4[%c1, %c0_13, %c0_14] : memref<3x128x128xbf16, #tpu.memory_space<vmem>>, vector<1x128x128xbf16>
    %45 = vector.shape_cast %44 : vector<1x128x128xbf16> to vector<128x128xbf16>
    %cst_15 = arith.constant dense<0.000000e+00> : vector<32x128xf32>
    %46 = tpu.matmul %43, %45, %cst_15 {dimension_numbers = #tpu.dot_dimension_numbers<[1], [0], [0], [1], [0, 0, 1, 1], [], []>} : vector<32x128xbf16>, vector<128x128xbf16>, vector<32x128xf32> -> vector<32x128xf32>
    %47 = arith.addf %42, %46 : vector<32x128xf32>
    %48 = arith.truncf %38 : vector<32x128xf32> to vector<32x128xbf16>
    %c2 = arith.constant 2 : index
    %c0_16 = arith.constant 0 : index
    %c0_17 = arith.constant 0 : index
    %49 = vector.load %arg4[%c2, %c0_16, %c0_17] : memref<3x128x128xbf16, #tpu.memory_space<vmem>>, vector<1x128x128xbf16>
    %50 = vector.shape_cast %49 : vector<1x128x128xbf16> to vector<128x128xbf16>
    %cst_18 = arith.constant dense<0.000000e+00> : vector<32x128xf32>
    %51 = tpu.matmul %48, %50, %cst_18 {dimension_numbers = #tpu.dot_dimension_numbers<[1], [0], [0], [1], [0, 0, 1, 1], [], []>} : vector<32x128xbf16>, vector<128x128xbf16>, vector<32x128xf32> -> vector<32x128xf32>
    %52 = arith.addf %47, %51 : vector<32x128xf32>
    %53 = arith.truncf %52 : vector<32x128xf32> to vector<32x128xbf16>
    %c0_19 = arith.constant 0 : index
    %c0_20 = arith.constant 0 : index
    %54 = vector.load %arg5[%c0_19, %c0_20] : memref<32x128xbf16, #tpu.memory_space<vmem>>, vector<32x128xbf16>
    tpu.vector_store %arg5[%c0_19, %c0_20], %53 {strides = array<i32>} : memref<32x128xbf16, #tpu.memory_space<vmem>>, vector<32x128xbf16>,
    %55 = arith.extf %53 : vector<32x128xbf16> to vector<32x128xf32>
    %cst_21 = arith.constant dense<0.000000e+00> : vector<128xf32>
    %56 = vector.multi_reduction <add>, %55, %cst_21 [0] : vector<32x128xf32> to vector<128xf32>
    %57 = vector.shape_cast %56 : vector<128xf32> to vector<1x128xf32>
    %58 = arith.mulf %55, %55 : vector<32x128xf32>
    %cst_22 = arith.constant dense<0.000000e+00> : vector<128xf32>
    %59 = vector.multi_reduction <add>, %58, %cst_22 [0] : vector<32x128xf32> to vector<128xf32>
    %60 = vector.shape_cast %59 : vector<128xf32> to vector<1x128xf32>
    %cst_23 = arith.constant 0.000000e+00 : f32
    %61 = vector.broadcast %cst_23 : f32 to vector<6x128xf32>
    %62 = tpu.concatenate %57, %60, %61 in 0 : vector<1x128xf32>, vector<1x128xf32>, vector<6x128xf32> -> vector<8x128xf32>
    %c0_24 = arith.constant 0 : index
    %c0_25 = arith.constant 0 : index
    %63 = vector.load %arg6[%c0_24, %c0_25] : memref<8x128xf32, #tpu.memory_space<vmem>>, vector<8x128xf32>
    tpu.vector_store %arg6[%c0_24, %c0_25], %62 {strides = array<i32>} : memref<8x128xf32, #tpu.memory_space<vmem>>, vector<8x128xf32>,
    return
  }
  func.func @transform_0(%arg0: i32) -> (i32, i32) {
    %c0_i32 = arith.constant 0 : i32
    %c0_i32_0 = arith.constant 0 : i32
    return %arg0, %c0_i32 : i32, i32
  }
  func.func @transform_1(%arg0: i32) -> (i32, i32) {
    %c4_i32 = arith.constant 4 : i32
    %0 = arith.muli %arg0, %c4_i32 : i32
    %c1_i32 = arith.constant 1 : i32
    %1 = arith.subi %0, %c1_i32 : i32
    %c0_i32 = arith.constant 0 : i32
    %2 = arith.maxsi %1, %c0_i32 : i32
    %c0_i32_0 = arith.constant 0 : i32
    %c0_i32_1 = arith.constant 0 : i32
    return %2, %c0_i32_0 : i32, i32
  }
  func.func @transform_2(%arg0: i32) -> (i32, i32) {
    %c1_i32 = arith.constant 1 : i32
    %0 = arith.addi %arg0, %c1_i32 : i32
    %c4_i32 = arith.constant 4 : i32
    %1 = arith.muli %0, %c4_i32 : i32
    %c3_i32 = arith.constant 3 : i32
    %2 = arith.minsi %1, %c3_i32 : i32
    %c0_i32 = arith.constant 0 : i32
    %c0_i32_0 = arith.constant 0 : i32
    return %2, %c0_i32 : i32, i32
  }
  func.func @transform_3(%arg0: i32) -> (i32, i32, i32) {
    %c0_i32 = arith.constant 0 : i32
    %c0_i32_0 = arith.constant 0 : i32
    %c0_i32_1 = arith.constant 0 : i32
    %c0_i32_2 = arith.constant 0 : i32
    return %c0_i32, %c0_i32_0, %c0_i32_1 : i32, i32, i32
  }
  func.func @transform_4(%arg0: i32) -> (i32, i32) {
    %c0_i32 = arith.constant 0 : i32
    %c0_i32_0 = arith.constant 0 : i32
    return %arg0, %c0_i32 : i32, i32
  }
  func.func @transform_5(%arg0: i32) -> (i32, i32) {
    %c0_i32 = arith.constant 0 : i32
    %c0_i32_0 = arith.constant 0 : i32
    return %arg0, %c0_i32 : i32, i32
  }
}

module attributes {stable_mosaic.version = 11 : i64} {
  func.func @_pass3_kernel(%arg0: i32, %arg1: memref<32x128xbf16, #tpu.memory_space<vmem>>, %arg2: memref<8x128xf32, #tpu.memory_space<vmem>>, %arg3: memref<32x128xf32, #tpu.memory_space<vmem>>, %arg4: memref<32x128xf32, #tpu.memory_space<vmem>>) attributes {dimension_semantics = [#tpu.dimension_semantics<parallel>], iteration_bounds = array<i64: 1>, scalar_prefetch = 0 : i64, scratch_operands = 0 : i64, tpu.core_type = #tpu.core_type<tc>, window_params = [{transform_indices = @transform_0, window_bounds = array<i64: 32, 128>}, {pipeline_mode = #tpu.pipeline_mode<synchronous>, transform_indices = @transform_1, window_bounds = array<i64: 8, 128>}, {transform_indices = @transform_2, window_bounds = array<i64: 32, 128>}, {transform_indices = @transform_3, window_bounds = array<i64: 32, 128>}]} {
    %c0 = arith.constant 0 : index
    %c0_0 = arith.constant 0 : index
    %0 = vector.load %arg2[%c0, %c0_0] : memref<8x128xf32, #tpu.memory_space<vmem>>, vector<1x128xf32>
    %c1 = arith.constant 1 : index
    %c0_1 = arith.constant 0 : index
    %1 = vector.load %arg2[%c1, %c0_1] : memref<8x128xf32, #tpu.memory_space<vmem>>, vector<1x128xf32>
    %c0_2 = arith.constant 0 : index
    %c0_3 = arith.constant 0 : index
    %2 = vector.load %arg1[%c0_2, %c0_3] : memref<32x128xbf16, #tpu.memory_space<vmem>>, vector<32x128xbf16>
    %3 = arith.extf %2 : vector<32x128xbf16> to vector<32x128xf32>
    %4 = vector.broadcast %0 : vector<1x128xf32> to vector<32x128xf32>
    %5 = arith.mulf %3, %4 : vector<32x128xf32>
    %6 = vector.broadcast %1 : vector<1x128xf32> to vector<32x128xf32>
    %7 = arith.addf %5, %6 : vector<32x128xf32>
    %c0_4 = arith.constant 0 : index
    %c0_5 = arith.constant 0 : index
    %8 = vector.load %arg3[%c0_4, %c0_5] : memref<32x128xf32, #tpu.memory_space<vmem>>, vector<32x128xf32>
    %9 = arith.addf %7, %8 : vector<32x128xf32>
    %cst = arith.constant 0.000000e+00 : f32
    %10 = vector.broadcast %cst : f32 to vector<32x128xf32>
    %11 = arith.maximumf %9, %10 : vector<32x128xf32>
    %c0_6 = arith.constant 0 : index
    %c0_7 = arith.constant 0 : index
    %12 = vector.load %arg4[%c0_6, %c0_7] : memref<32x128xf32, #tpu.memory_space<vmem>>, vector<32x128xf32>
    tpu.vector_store %arg4[%c0_6, %c0_7], %11 {strides = array<i32>} : memref<32x128xf32, #tpu.memory_space<vmem>>, vector<32x128xf32>,
    return
  }
  func.func @transform_0(%arg0: i32) -> (i32, i32) {
    %c0_i32 = arith.constant 0 : i32
    %c0_i32_0 = arith.constant 0 : i32
    return %arg0, %c0_i32 : i32, i32
  }
  func.func @transform_1(%arg0: i32) -> (i32, i32) {
    %c0_i32 = arith.constant 0 : i32
    %c0_i32_0 = arith.constant 0 : i32
    %c0_i32_1 = arith.constant 0 : i32
    return %c0_i32, %c0_i32_0 : i32, i32
  }
  func.func @transform_2(%arg0: i32) -> (i32, i32) {
    %c0_i32 = arith.constant 0 : i32
    %c0_i32_0 = arith.constant 0 : i32
    return %arg0, %c0_i32 : i32, i32
  }
  func.func @transform_3(%arg0: i32) -> (i32, i32) {
    %c0_i32 = arith.constant 0 : i32
    %c0_i32_0 = arith.constant 0 : i32
    return %arg0, %c0_i32 : i32, i32
  }
}

module attributes {stable_mosaic.version = 11 : i64} {
  func.func @_pass2_kernel(%arg0: i32, %arg1: memref<32x128xbf16, #tpu.memory_space<vmem>>, %arg2: memref<8x128xbf16, #tpu.memory_space<vmem>>, %arg3: memref<8x128xbf16, #tpu.memory_space<vmem>>, %arg4: memref<8x128xf32, #tpu.memory_space<vmem>>, %arg5: memref<3x128x128xbf16, #tpu.memory_space<vmem>>, %arg6: memref<32x128xbf16, #tpu.memory_space<vmem>>, %arg7: memref<8x128xf32, #tpu.memory_space<vmem>>) attributes {dimension_semantics = [#tpu.dimension_semantics<parallel>], iteration_bounds = array<i64: 1>, scalar_prefetch = 0 : i64, scratch_operands = 0 : i64, tpu.core_type = #tpu.core_type<tc>, window_params = [{transform_indices = @transform_0, window_bounds = array<i64: 32, 128>}, {transform_indices = @transform_1, window_bounds = array<i64: 8, 128>}, {transform_indices = @transform_2, window_bounds = array<i64: 8, 128>}, {pipeline_mode = #tpu.pipeline_mode<synchronous>, transform_indices = @transform_3, window_bounds = array<i64: 8, 128>}, {pipeline_mode = #tpu.pipeline_mode<synchronous>, transform_indices = @transform_4, window_bounds = array<i64: 3, 128, 128>}, {transform_indices = @transform_5, window_bounds = array<i64: 32, 128>}, {transform_indices = @transform_6, window_bounds = array<i64: 8, 128>}]} {
    %c32_i32 = arith.constant 32 : i32
    %0 = arith.muli %arg0, %c32_i32 : i32
    %1 = tpu.iota {dimensions = array<i32: 0>} : vector<32x1xi32>
    %2 = vector.broadcast %0 : i32 to vector<32x1xi32>
    %3 = arith.addi %2, %1 : vector<32x1xi32>
    %c16_i32 = arith.constant 16 : i32
    %c0_i32 = arith.constant 0 : i32
    %4 = arith.cmpi eq, %c16_i32, %c0_i32 : i32
    %c1_i32 = arith.constant 1 : i32
    %5 = arith.select %4, %c1_i32, %c16_i32 : i32
    %6 = vector.broadcast %5 : i32 to vector<32x1xi32>
    %7 = arith.remsi %3, %6 : vector<32x1xi32>
    %c0_i32_0 = arith.constant 0 : i32
    %8 = vector.broadcast %c0_i32_0 : i32 to vector<32x1xi32>
    %9 = arith.cmpi ne, %7, %8 : vector<32x1xi32>
    %c0_i32_1 = arith.constant 0 : i32
    %10 = vector.broadcast %c0_i32_1 : i32 to vector<32x1xi32>
    %11 = arith.cmpi slt, %7, %10 : vector<32x1xi32>
    %c0_i32_2 = arith.constant 0 : i32
    %12 = arith.cmpi slt, %5, %c0_i32_2 : i32
    %13 = vector.broadcast %12 : i1 to vector<32x1xi1>
    %14 = vector.broadcast %13 : vector<32x1xi1> to vector<32x1xi1>
    %15 = arith.xori %11, %14 : vector<32x1xi1>
    %16 = arith.andi %15, %9 : vector<32x1xi1>
    %17 = vector.broadcast %5 : i32 to vector<32x1xi32>
    %18 = arith.addi %7, %17 : vector<32x1xi32>
    %19 = arith.select %16, %18, %7 : vector<32x1xi1>, vector<32x1xi32>
    %c0_i32_3 = arith.constant 0 : i32
    %20 = vector.broadcast %c0_i32_3 : i32 to vector<32x1xi32>
    %21 = arith.cmpi eq, %19, %20 : vector<32x1xi32>
    %c15_i32 = arith.constant 15 : i32
    %22 = vector.broadcast %c15_i32 : i32 to vector<32x1xi32>
    %23 = arith.cmpi eq, %19, %22 : vector<32x1xi32>
    %c0 = arith.constant 0 : index
    %c0_4 = arith.constant 0 : index
    %24 = vector.load %arg4[%c0, %c0_4] : memref<8x128xf32, #tpu.memory_space<vmem>>, vector<1x128xf32>
    %c1 = arith.constant 1 : index
    %c0_5 = arith.constant 0 : index
    %25 = vector.load %arg4[%c1, %c0_5] : memref<8x128xf32, #tpu.memory_space<vmem>>, vector<1x128xf32>
    %c0_6 = arith.constant 0 : index
    %c0_7 = arith.constant 0 : index
    %26 = vector.load %arg1[%c0_6, %c0_7] : memref<32x128xbf16, #tpu.memory_space<vmem>>, vector<32x128xbf16>
    %27 = arith.extf %26 : vector<32x128xbf16> to vector<32x128xf32>
    %28 = vector.broadcast %24 : vector<1x128xf32> to vector<32x128xf32>
    %29 = arith.mulf %27, %28 : vector<32x128xf32>
    %30 = vector.broadcast %25 : vector<1x128xf32> to vector<32x128xf32>
    %31 = arith.addf %29, %30 : vector<32x128xf32>
    %cst = arith.constant 0.000000e+00 : f32
    %32 = vector.broadcast %cst : f32 to vector<32x128xf32>
    %33 = arith.maximumf %31, %32 : vector<32x128xf32>
    %c7 = arith.constant 7 : index
    %c0_8 = arith.constant 0 : index
    %34 = vector.load %arg2[%c7, %c0_8] : memref<8x128xbf16, #tpu.memory_space<vmem>>, vector<1x128xbf16>
    %35 = arith.extf %34 : vector<1x128xbf16> to vector<1x128xf32>
    %36 = arith.mulf %35, %24 : vector<1x128xf32>
    %37 = arith.addf %36, %25 : vector<1x128xf32>
    %cst_9 = arith.constant 0.000000e+00 : f32
    %38 = vector.broadcast %cst_9 : f32 to vector<1x128xf32>
    %39 = arith.maximumf %37, %38 : vector<1x128xf32>
    %c0_10 = arith.constant 0 : index
    %c0_11 = arith.constant 0 : index
    %40 = vector.load %arg3[%c0_10, %c0_11] : memref<8x128xbf16, #tpu.memory_space<vmem>>, vector<1x128xbf16>
    %41 = arith.extf %40 : vector<1x128xbf16> to vector<1x128xf32>
    %42 = arith.mulf %41, %24 : vector<1x128xf32>
    %43 = arith.addf %42, %25 : vector<1x128xf32>
    %cst_12 = arith.constant 0.000000e+00 : f32
    %44 = vector.broadcast %cst_12 : f32 to vector<1x128xf32>
    %45 = arith.maximumf %43, %44 : vector<1x128xf32>
    %46 = vector.extract_strided_slice %33 {offsets = [0, 0], sizes = [31, 128], strides = [1, 1]} : vector<32x128xf32> to vector<31x128xf32>
    %47 = tpu.concatenate %39, %46 in 0 : vector<1x128xf32>, vector<31x128xf32> -> vector<32x128xf32>
    %cst_13 = arith.constant 0.000000e+00 : f32
    %48 = vector.shape_cast %21 : vector<32x1xi1> to vector<32x1xi1>
    %49 = vector.broadcast %48 : vector<32x1xi1> to vector<32x128xi1>
    %50 = vector.broadcast %cst_13 : f32 to vector<32x128xf32>
    %51 = arith.select %49, %50, %47 : vector<32x128xi1>, vector<32x128xf32>
    %52 = vector.extract_strided_slice %33 {offsets = [1, 0], sizes = [31, 128], strides = [1, 1]} : vector<32x128xf32> to vector<31x128xf32>
    %53 = tpu.concatenate %52, %45 in 0 : vector<31x128xf32>, vector<1x128xf32> -> vector<32x128xf32>
    %cst_14 = arith.constant 0.000000e+00 : f32
    %54 = vector.shape_cast %23 : vector<32x1xi1> to vector<32x1xi1>
    %55 = vector.broadcast %54 : vector<32x1xi1> to vector<32x128xi1>
    %56 = vector.broadcast %cst_14 : f32 to vector<32x128xf32>
    %57 = arith.select %55, %56, %53 : vector<32x128xi1>, vector<32x128xf32>
    %58 = arith.truncf %51 : vector<32x128xf32> to vector<32x128xbf16>
    %c0_15 = arith.constant 0 : index
    %c0_16 = arith.constant 0 : index
    %c0_17 = arith.constant 0 : index
    %59 = vector.load %arg5[%c0_15, %c0_16, %c0_17] : memref<3x128x128xbf16, #tpu.memory_space<vmem>>, vector<1x128x128xbf16>
    %60 = vector.shape_cast %59 : vector<1x128x128xbf16> to vector<128x128xbf16>
    %cst_18 = arith.constant dense<0.000000e+00> : vector<32x128xf32>
    %61 = tpu.matmul %58, %60, %cst_18 {dimension_numbers = #tpu.dot_dimension_numbers<[1], [0], [0], [1], [0, 0, 1, 1], [], []>} : vector<32x128xbf16>, vector<128x128xbf16>, vector<32x128xf32> -> vector<32x128xf32>
    %62 = arith.truncf %33 : vector<32x128xf32> to vector<32x128xbf16>
    %c1_19 = arith.constant 1 : index
    %c0_20 = arith.constant 0 : index
    %c0_21 = arith.constant 0 : index
    %63 = vector.load %arg5[%c1_19, %c0_20, %c0_21] : memref<3x128x128xbf16, #tpu.memory_space<vmem>>, vector<1x128x128xbf16>
    %64 = vector.shape_cast %63 : vector<1x128x128xbf16> to vector<128x128xbf16>
    %cst_22 = arith.constant dense<0.000000e+00> : vector<32x128xf32>
    %65 = tpu.matmul %62, %64, %cst_22 {dimension_numbers = #tpu.dot_dimension_numbers<[1], [0], [0], [1], [0, 0, 1, 1], [], []>} : vector<32x128xbf16>, vector<128x128xbf16>, vector<32x128xf32> -> vector<32x128xf32>
    %66 = arith.addf %61, %65 : vector<32x128xf32>
    %67 = arith.truncf %57 : vector<32x128xf32> to vector<32x128xbf16>
    %c2 = arith.constant 2 : index
    %c0_23 = arith.constant 0 : index
    %c0_24 = arith.constant 0 : index
    %68 = vector.load %arg5[%c2, %c0_23, %c0_24] : memref<3x128x128xbf16, #tpu.memory_space<vmem>>, vector<1x128x128xbf16>
    %69 = vector.shape_cast %68 : vector<1x128x128xbf16> to vector<128x128xbf16>
    %cst_25 = arith.constant dense<0.000000e+00> : vector<32x128xf32>
    %70 = tpu.matmul %67, %69, %cst_25 {dimension_numbers = #tpu.dot_dimension_numbers<[1], [0], [0], [1], [0, 0, 1, 1], [], []>} : vector<32x128xbf16>, vector<128x128xbf16>, vector<32x128xf32> -> vector<32x128xf32>
    %71 = arith.addf %66, %70 : vector<32x128xf32>
    %72 = arith.truncf %71 : vector<32x128xf32> to vector<32x128xbf16>
    %c0_26 = arith.constant 0 : index
    %c0_27 = arith.constant 0 : index
    %73 = vector.load %arg6[%c0_26, %c0_27] : memref<32x128xbf16, #tpu.memory_space<vmem>>, vector<32x128xbf16>
    tpu.vector_store %arg6[%c0_26, %c0_27], %72 {strides = array<i32>} : memref<32x128xbf16, #tpu.memory_space<vmem>>, vector<32x128xbf16>,
    %74 = arith.extf %72 : vector<32x128xbf16> to vector<32x128xf32>
    %cst_28 = arith.constant dense<0.000000e+00> : vector<128xf32>
    %75 = vector.multi_reduction <add>, %74, %cst_28 [0] : vector<32x128xf32> to vector<128xf32>
    %76 = vector.shape_cast %75 : vector<128xf32> to vector<1x128xf32>
    %77 = arith.mulf %74, %74 : vector<32x128xf32>
    %cst_29 = arith.constant dense<0.000000e+00> : vector<128xf32>
    %78 = vector.multi_reduction <add>, %77, %cst_29 [0] : vector<32x128xf32> to vector<128xf32>
    %79 = vector.shape_cast %78 : vector<128xf32> to vector<1x128xf32>
    %cst_30 = arith.constant 0.000000e+00 : f32
    %80 = vector.broadcast %cst_30 : f32 to vector<6x128xf32>
    %81 = tpu.concatenate %76, %79, %80 in 0 : vector<1x128xf32>, vector<1x128xf32>, vector<6x128xf32> -> vector<8x128xf32>
    %c0_31 = arith.constant 0 : index
    %c0_32 = arith.constant 0 : index
    %82 = vector.load %arg7[%c0_31, %c0_32] : memref<8x128xf32, #tpu.memory_space<vmem>>, vector<8x128xf32>
    tpu.vector_store %arg7[%c0_31, %c0_32], %81 {strides = array<i32>} : memref<8x128xf32, #tpu.memory_space<vmem>>, vector<8x128xf32>,
    return
  }
  func.func @transform_0(%arg0: i32) -> (i32, i32) {
    %c0_i32 = arith.constant 0 : i32
    %c0_i32_0 = arith.constant 0 : i32
    return %arg0, %c0_i32 : i32, i32
  }
  func.func @transform_1(%arg0: i32) -> (i32, i32) {
    %c4_i32 = arith.constant 4 : i32
    %0 = arith.muli %arg0, %c4_i32 : i32
    %c1_i32 = arith.constant 1 : i32
    %1 = arith.subi %0, %c1_i32 : i32
    %c0_i32 = arith.constant 0 : i32
    %2 = arith.maxsi %1, %c0_i32 : i32
    %c0_i32_0 = arith.constant 0 : i32
    %c0_i32_1 = arith.constant 0 : i32
    return %2, %c0_i32_0 : i32, i32
  }
  func.func @transform_2(%arg0: i32) -> (i32, i32) {
    %c1_i32 = arith.constant 1 : i32
    %0 = arith.addi %arg0, %c1_i32 : i32
    %c4_i32 = arith.constant 4 : i32
    %1 = arith.muli %0, %c4_i32 : i32
    %c3_i32 = arith.constant 3 : i32
    %2 = arith.minsi %1, %c3_i32 : i32
    %c0_i32 = arith.constant 0 : i32
    %c0_i32_0 = arith.constant 0 : i32
    return %2, %c0_i32 : i32, i32
  }
  func.func @transform_3(%arg0: i32) -> (i32, i32) {
    %c0_i32 = arith.constant 0 : i32
    %c0_i32_0 = arith.constant 0 : i32
    %c0_i32_1 = arith.constant 0 : i32
    return %c0_i32, %c0_i32_0 : i32, i32
  }
  func.func @transform_4(%arg0: i32) -> (i32, i32, i32) {
    %c0_i32 = arith.constant 0 : i32
    %c0_i32_0 = arith.constant 0 : i32
    %c0_i32_1 = arith.constant 0 : i32
    %c0_i32_2 = arith.constant 0 : i32
    return %c0_i32, %c0_i32_0, %c0_i32_1 : i32, i32, i32
  }
  func.func @transform_5(%arg0: i32) -> (i32, i32) {
    %c0_i32 = arith.constant 0 : i32
    %c0_i32_0 = arith.constant 0 : i32
    return %arg0, %c0_i32 : i32, i32
  }
  func.func @transform_6(%arg0: i32) -> (i32, i32) {
    %c0_i32 = arith.constant 0 : i32
    %c0_i32_0 = arith.constant 0 : i32
    return %arg0, %c0_i32 : i32, i32
  }
}

</mosaic_0001>

<llo_original>
// kernel: basic_block_forward.5
$region0: #{basic_block_forward.5}
  #allocation0 [shape = 'u32[]', space=smem, size = 0x4, offset = 0x4, fixed_abs, tag = 'smem constant byte address 0x4 - core index']
  #allocation1 [shape = 'u32[144,128]{1,0:T(1,128)}', space=vmem, size = 0x12000, scoped, tag = 'internal scratch']
  %s0 = inlined_call_operand.vmem [shape: bf16[32,128], index: 0, kind: input, shape index: {}]
  %s1 = inlined_call_operand.vmem [shape: f32[8,128], index: 1, kind: input, shape index: {}]
  %s2 = inlined_call_operand.vmem [shape: f32[32,128], index: 2, kind: input, shape index: {}]
  %s3 = inlined_call_operand.vmem [shape: f32[32,128], index: 3, kind: output, shape index: {}]
  %s4 = sld [smem:[#allocation0]]
  $region22: #{basic_block_forward.5} parent=0
    _
  %s6 = ssub.s32 1, %s4
  %s7 = scalar_select 0, %s6, %s4
  // Predicated region
  $region2: #{basic_block_forward.5} parent=0 // pred_check
    _
  $region3: #{basic_block_forward.5} parent=0 // pred_check_branch
    %9 = sbr.rel (0) target = $region5
  $region4: #{basic_block_forward.5} parent=0 // pred_region
    _
  $region5: #{basic_block_forward.5} parent=0 // pred_fallthru
    _
  // Predicated region
  $region6: #{basic_block_forward.5} parent=0 // pred_check
    _
  $region7: #{basic_block_forward.5} parent=0 // pred_check_branch
    %11 = sbr.rel (0) target = $region9
  $region8: #{basic_block_forward.5} parent=0 // pred_region
    _
  $region9: #{basic_block_forward.5} parent=0 // pred_fallthru
    _
  // Predicated region
  $region10: #{basic_block_forward.5} parent=0 // pred_check
    _
  $region11: #{basic_block_forward.5} parent=0 // pred_check_branch
    %13 = sbr.rel (0) target = $region13
  $region12: #{basic_block_forward.5} parent=0 // pred_region
    _
  $region13: #{basic_block_forward.5} parent=0 // pred_fallthru
    _
  %v14 = vld [vmem:[%s1] sm:$0x1]
  %v15 = vld [vmem:[%s1 + $0x1] sm:$0x1]
  %v16 = vld [vmem:[%s0] sm:$0xf]
  %v17 = vld [vmem:[%s0 + $0x4] sm:$0xf]
  %v18 = vld [vmem:[%s0 + $0x8] sm:$0xf]
  %v19 = vld [vmem:[%s0 + $0xc] sm:$0xf]
  %v20 = vunpack.c.l.bf16 %v16
  %v21 = vunpack.c.l.bf16 %v17
  %v22 = vunpack.c.l.bf16 %v18
  %v23 = vunpack.c.l.bf16 %v19
  %v24 = vlaneseq
  %v25 = vshrl.u32 %v24, 7
  %v26 = vsub.s32 0, %v25
  %v27 = vrot.slane %v14, %v26
  %v28 = vmul.f32 %v20, %v27
  %v29 = vmul.f32 %v21, %v27
  %v30 = vmul.f32 %v22, %v27
  %v31 = vmul.f32 %v23, %v27
  %v32 = vlaneseq
  %v33 = vshrl.u32 %v32, 7
  %v34 = vsub.s32 0, %v33
  %v35 = vrot.slane %v15, %v34
  %v36 = vadd.f32 %v28, %v35
  %v37 = vadd.f32 %v29, %v35
  %v38 = vadd.f32 %v30, %v35
  %v39 = vadd.f32 %v31, %v35
  %v40 = vld [vmem:[%s2] sm:$0xff]
  %v41 = vld [vmem:[%s2 + $0x8] sm:$0xff]
  %v42 = vld [vmem:[%s2 + $0x10] sm:$0xff]
  %v43 = vld [vmem:[%s2 + $0x18] sm:$0xff]
  %v44 = vadd.f32 %v36, %v40
  %v45 = vadd.f32 %v37, %v41
  %v46 = vadd.f32 %v38, %v42
  %v47 = vadd.f32 %v39, %v43
  %v48 = vmax.f32 %v44, 0.0
  %v49 = vmax.f32 %v45, 0.0
  %v50 = vmax.f32 %v46, 0.0
  %v51 = vmax.f32 %v47, 0.0
  %52 = vst [vmem:[%s3] sm:$0xff] %v48
  %53 = vst [vmem:[%s3 + $0x8] sm:$0xff] %v49
  %54 = vst [vmem:[%s3 + $0x10] sm:$0xff] %v50
  %55 = vst [vmem:[%s3 + $0x18] sm:$0xff] %v51
  // Predicated region
  $region14: #{basic_block_forward.5} parent=0 // pred_check
    _
  $region15: #{basic_block_forward.5} parent=0 // pred_check_branch
    %57 = sbr.rel (0) target = $region17
  $region16: #{basic_block_forward.5} parent=0 // pred_region
    _
  $region17: #{basic_block_forward.5} parent=0 // pred_fallthru
    _
  // Predicated region
  $region18: #{basic_block_forward.5} parent=0 // pred_check
    _
  $region19: #{basic_block_forward.5} parent=0 // pred_check_branch
    %59 = sbr.rel (0) target = $region21
  $region20: #{basic_block_forward.5} parent=0 // pred_region
    _
  $region21: #{basic_block_forward.5} parent=0 // pred_fallthru
    _

// kernel: basic_block_forward.4
$region0: #{basic_block_forward.4}
  #allocation0 [shape = 'u32[]', space=smem, size = 0x4, offset = 0x4, fixed_abs, tag = 'smem constant byte address 0x4 - core index']
  #allocation1 [shape = 'u32[144,128]{1,0:T(1,128)}', space=vmem, size = 0x12000, scoped, tag = 'internal scratch']
  %s0 = inlined_call_operand.vmem [shape: bf16[32,128], index: 0, kind: input, shape index: {}, may-alias: {0,1,2}]
  %s1 = inlined_call_operand.vmem [shape: bf16[32,128], index: 1, kind: input, shape index: {}, may-alias: {0,1,2}]
  %s2 = inlined_call_operand.vmem [shape: bf16[32,128], index: 2, kind: input, shape index: {}, may-alias: {0,1,2}]
  %s3 = inlined_call_operand.vmem [shape: f32[8,128], index: 3, kind: input, shape index: {}]
  %s4 = inlined_call_operand.vmem [shape: bf16[3,128,128], index: 4, kind: input, shape index: {}]
  %s5 = inlined_call_operand.vmem [shape: bf16[32,128], index: 5, kind: output, shape index: {0}]
  %s6 = inlined_call_operand.vmem [shape: f32[8,128], index: 6, kind: output, shape index: {1}]
  %7 = xla_tuple %s5, %s6
  %s8 = sld [smem:[#allocation0]]
  $region38: #{basic_block_forward.4} parent=0
    _
  %s10 = ssub.s32 1, %s8
  %s11 = scalar_select 0, %s10, %s8
  // Predicated region
  $region2: #{basic_block_forward.4} parent=0 // pred_check
    _
  $region3: #{basic_block_forward.4} parent=0 // pred_check_branch
    %13 = sbr.rel (0) target = $region5
  $region4: #{basic_block_forward.4} parent=0 // pred_region
    _
  $region5: #{basic_block_forward.4} parent=0 // pred_fallthru
    _
  // Predicated region
  $region6: #{basic_block_forward.4} parent=0 // pred_check
    _
  $region7: #{basic_block_forward.4} parent=0 // pred_check_branch
    %15 = sbr.rel (0) target = $region9
  $region8: #{basic_block_forward.4} parent=0 // pred_region
    %s16 = smul.u32 0, 4
    %s17 = ssub.s32 %s16, 1
    %p18 = scmp.gt.s32.totalorder %s17, 0
    %s19 = scalar_select %p18, %s17, 0
    %p20 = scmp.lt.s32.totalorder %s19, 3
    %s21 = scalar_select %p20, %s19, 3
    %s22 = smul.addr %s21, 4
    %s23 = scalar_lea.vmem %s1, %s22
    %s24 = smul.u32 0, 4
    %s25 = ssub.s32 %s24, 1
    %p26 = scmp.gt.s32.totalorder %s25, 0
    %s27 = scalar_select %p26, %s25, 0
  $region9: #{basic_block_forward.4} parent=0 // pred_fallthru
    _
  // Predicated region
  $region10: #{basic_block_forward.4} parent=0 // pred_check
    _
  $region11: #{basic_block_forward.4} parent=0 // pred_check_branch
    %29 = sbr.rel (0) target = $region13
  $region12: #{basic_block_forward.4} parent=0 // pred_region
    %s30 = sadd.s32 0, 1
    %s31 = smul.u32 %s30, 4
    %p32 = scmp.lt.s32.totalorder %s31, 3
    %s33 = scalar_select %p32, %s31, 3
    %p34 = scmp.lt.s32.totalorder %s33, 3
    %s35 = scalar_select %p34, %s33, 3
    %s36 = smul.addr %s35, 4
    %s37 = scalar_lea.vmem %s2, %s36
    %s38 = sadd.s32 0, 1
    %s39 = smul.u32 %s38, 4
    %p40 = scmp.lt.s32.totalorder %s39, 3
    %s41 = scalar_select %p40, %s39, 3
  $region13: #{basic_block_forward.4} parent=0 // pred_fallthru
    _
  // Predicated region
  $region14: #{basic_block_forward.4} parent=0 // pred_check
    _
  $region15: #{basic_block_forward.4} parent=0 // pred_check_branch
    %43 = sbr.rel (0) target = $region17
  $region16: #{basic_block_forward.4} parent=0 // pred_region
    _
  $region17: #{basic_block_forward.4} parent=0 // pred_fallthru
    _
  // Predicated region
  $region18: #{basic_block_forward.4} parent=0 // pred_check
    _
  $region19: #{basic_block_forward.4} parent=0 // pred_check_branch
    %45 = sbr.rel (0) target = $region21
  $region20: #{basic_block_forward.4} parent=0 // pred_region
    _
  $region21: #{basic_block_forward.4} parent=0 // pred_fallthru
    _
  %s46 = smul.u32 0, 4
  %s47 = ssub.s32 %s46, 1
  %p48 = scmp.gt.s32.totalorder %s47, 0
  %s49 = scalar_select %p48, %s47, 0
  %p50 = scmp.lt.s32.totalorder %s49, 3
  %s51 = scalar_select %p50, %s49, 3
  %s52 = smul.addr %s51, 4
  %s53 = scalar_lea.vmem %s1, %s52
  %s54 = sadd.s32 0, 1
  %s55 = smul.u32 %s54, 4
  %p56 = scmp.lt.s32.totalorder %s55, 3
  %s57 = scalar_select %p56, %s55, 3
  %p58 = scmp.lt.s32.totalorder %s57, 3
  %s59 = scalar_select %p58, %s57, 3
  %s60 = smul.addr %s59, 4
  %s61 = scalar_lea.vmem %s2, %s60
  %s62 = smul.u32 0, 4
  %s63 = ssub.s32 %s62, 1
  %p64 = scmp.gt.s32.totalorder %s63, 0
  %s65 = scalar_select %p64, %s63, 0
  %p66 = scmp.lt.s32.totalorder %s65, 3
  %s67 = scalar_select %p66, %s65, 3
  %s68 = smul.addr %s67, 4
  %s69 = scalar_lea.vmem %s1, %s68
  %s70 = smul.u32 0, 4
  %s71 = ssub.s32 %s70, 1
  %p72 = scmp.gt.s32.totalorder %s71, 0
  %s73 = scalar_select %p72, %s71, 0
  %s74 = sadd.s32 0, 1
  %s75 = smul.u32 %s74, 4
  %p76 = scmp.lt.s32.totalorder %s75, 3
  %s77 = scalar_select %p76, %s75, 3
  %p78 = scmp.lt.s32.totalorder %s77, 3
  %s79 = scalar_select %p78, %s77, 3
  %s80 = smul.addr %s79, 4
  %s81 = scalar_lea.vmem %s2, %s80
  %s82 = sadd.s32 0, 1
  %s83 = smul.u32 %s82, 4
  %p84 = scmp.lt.s32.totalorder %s83, 3
  %s85 = scalar_select %p84, %s83, 3
  %s87 = smul.u32 0, 32
  %v88 = vlaneseq
  %v89 = vshrl.u32 %v88, 7
  %v90 = vadd.s32 %v89, 8
  %v91 = vadd.s32 %v89, 16
  %v92 = vadd.s32 %v89, 24
  %v93 = vstv %s87
  %v94 = vadd.s32 %v93, %v89
  %v95 = vadd.s32 %v93, %v90
  %v96 = vadd.s32 %v93, %v91
  %v97 = vadd.s32 %v93, %v92
  %vm98 = vcmp.lt.s32.totalorder %v94, 0
  %v99 = vsub.s32 0, %v94
  %v100 = vsel %vm98, %v99, %v94
  %v101 = vshrl.u32 %v100, 4
  %v102 = vand.u32 %v100, 15
  %v103 = vsub.s32 0, %v102
  %v104 = vsel %vm98, %v103, %v102
  %vm105 = vcmp.lt.s32.totalorder %v95, 0
  %v106 = vsub.s32 0, %v95
  %v107 = vsel %vm105, %v106, %v95
  %v108 = vshrl.u32 %v107, 4
  %v109 = vand.u32 %v107, 15
  %v110 = vsub.s32 0, %v109
  %v111 = vsel %vm105, %v110, %v109
  %vm112 = vcmp.lt.s32.totalorder %v96, 0
  %v113 = vsub.s32 0, %v96
  %v114 = vsel %vm112, %v113, %v96
  %v115 = vshrl.u32 %v114, 4
  %v116 = vand.u32 %v114, 15
  %v117 = vsub.s32 0, %v116
  %v118 = vsel %vm112, %v117, %v116
  %vm119 = vcmp.lt.s32.totalorder %v97, 0
  %v120 = vsub.s32 0, %v97
  %v121 = vsel %vm119, %v120, %v97
  %v122 = vshrl.u32 %v121, 4
  %v123 = vand.u32 %v121, 15
  %v124 = vsub.s32 0, %v123
  %v125 = vsel %vm119, %v124, %v123
  %vm126 = vcmp.ne.s32.totalorder %v104, 0
  %vm127 = vcmp.ne.s32.totalorder %v111, 0
  %vm128 = vcmp.ne.s32.totalorder %v118, 0
  %vm129 = vcmp.ne.s32.totalorder %v125, 0
  %vm130 = vcmp.lt.s32.totalorder %v104, 0
  %vm131 = vcmp.lt.s32.totalorder %v111, 0
  %vm132 = vcmp.lt.s32.totalorder %v118, 0
  %vm133 = vcmp.lt.s32.totalorder %v125, 0
  %vm134 = vmand %vm130, %vm126
  %vm135 = vmand %vm131, %vm127
  %vm136 = vmand %vm132, %vm128
  %vm137 = vmand %vm133, %vm129
  %v138 = vadd.s32 %v104, 16
  %v139 = vadd.s32 %v111, 16
  %v140 = vadd.s32 %v118, 16
  %v141 = vadd.s32 %v125, 16
  %v142 = vsel %vm134, %v138, %v104
  %v143 = vsel %vm135, %v139, %v111
  %v144 = vsel %vm136, %v140, %v118
  %v145 = vsel %vm137, %v141, %v125
  %vm146 = vcmp.eq.s32.totalorder %v142, 0
  %vm147 = vcmp.eq.s32.totalorder %v143, 0
  %vm148 = vcmp.eq.s32.totalorder %v144, 0
  %vm149 = vcmp.eq.s32.totalorder %v145, 0
  %vm150 = vcmp.eq.s32.totalorder %v142, 15
  %vm151 = vcmp.eq.s32.totalorder %v143, 15
  %vm152 = vcmp.eq.s32.totalorder %v144, 15
  %vm153 = vcmp.eq.s32.totalorder %v145, 15
  %v154 = vld [vmem:[%s3] sm:$0x1]
  %v155 = vld [vmem:[%s3 + $0x1] sm:$0x1]
  %v156 = vld [vmem:[%s0] sm:$0xf]
  %v157 = vld [vmem:[%s0 + $0x4] sm:$0xf]
  %v158 = vld [vmem:[%s0 + $0x8] sm:$0xf]
  %v159 = vld [vmem:[%s0 + $0xc] sm:$0xf]
  %v160 = vunpack.c.l.bf16 %v156
  %v161 = vunpack.c.l.bf16 %v157
  %v162 = vunpack.c.l.bf16 %v158
  %v163 = vunpack.c.l.bf16 %v159
  %v164 = vlaneseq
  %v165 = vshrl.u32 %v164, 7
  %v166 = vsub.s32 0, %v165
  %v167 = vrot.slane %v154, %v166
  %v168 = vmul.f32 %v160, %v167
  %v169 = vmul.f32 %v161, %v167
  %v170 = vmul.f32 %v162, %v167
  %v171 = vmul.f32 %v163, %v167
  %v172 = vlaneseq
  %v173 = vshrl.u32 %v172, 7
  %v174 = vsub.s32 0, %v173
  %v175 = vrot.slane %v155, %v174
  %v176 = vadd.f32 %v168, %v175
  %v177 = vadd.f32 %v169, %v175
  %v178 = vadd.f32 %v170, %v175
  %v179 = vadd.f32 %v171, %v175
  %v180 = vmax.f32 %v176, 0.0
  %v181 = vmax.f32 %v177, 0.0
  %v182 = vmax.f32 %v178, 0.0
  %v183 = vmax.f32 %v179, 0.0
  %v184 = vld [vmem:[%s69] sm:$0x8]
  %v185 = vunpack.c.l.bf16 %v184
  %v187 = vrot.slane %v154, 1
  %v189 = vmul.f32 %v185, %v187
  %v191 = vrot.slane %v155, 1
  %v193 = vadd.f32 %v189, %v191
  %v194 = vmax.f32 %v193, 0.0
  %v195 = vld [vmem:[%s81] sm:$0x1]
  %v196 = vunpack.c.l.bf16 %v195
  %v197 = vmul.f32 %v196, %v154
  %v198 = vadd.f32 %v197, %v155
  %v199 = vmax.f32 %v198, 0.0
  %v201 = vrot.slane %v194, 7
  %vm207 = vcmask 1040384
  %v208 = vrot.slane %v180, 7
  %v209 = vrot.slane %v181, 7
  %v210 = vsel %vm207, %v208, %v209
  %v211 = vrot.slane %v182, 7
  %v212 = vsel %vm207, %v209, %v211
  %v213 = vrot.slane %v183, 7
  %v214 = vsel %vm207, %v211, %v213
  %v219 = vsel %vm207, %v201, %v208
  %v220 = vsel %vm146, 1, 0
  %v221 = vsel %vm147, 1, 0
  %v222 = vsel %vm148, 1, 0
  %v223 = vsel %vm149, 1, 0
  %vm224 = vcmp.eq.s32.totalorder %v220, 1
  %vm225 = vcmp.eq.s32.totalorder %v221, 1
  %vm226 = vcmp.eq.s32.totalorder %v222, 1
  %vm227 = vcmp.eq.s32.totalorder %v223, 1
  %v228 = vsel %vm224, 0.0, %v219
  %v229 = vsel %vm225, 0.0, %v210
  %v230 = vsel %vm226, 0.0, %v212
  %v231 = vsel %vm227, 0.0, %v214
  %vm232 = vcmask 1046528
  %v233 = vrot.slane %v180, 1
  %v234 = vrot.slane %v181, 1
  %v235 = vsel %vm232, %v233, %v234
  %v236 = vrot.slane %v182, 1
  %v237 = vsel %vm232, %v234, %v236
  %v238 = vrot.slane %v183, 1
  %v239 = vsel %vm232, %v236, %v238
  %v245 = vrot.slane %v199, 1
  %v247 = vsel %vm232, %v238, %v245
  %v248 = vsel %vm150, 1, 0
  %v249 = vsel %vm151, 1, 0
  %v250 = vsel %vm152, 1, 0
  %v251 = vsel %vm153, 1, 0
  %vm252 = vcmp.eq.s32.totalorder %v248, 1
  %vm253 = vcmp.eq.s32.totalorder %v249, 1
  %vm254 = vcmp.eq.s32.totalorder %v250, 1
  %vm255 = vcmp.eq.s32.totalorder %v251, 1
  %v256 = vsel %vm252, 0.0, %v235
  %v257 = vsel %vm253, 0.0, %v237
  %v258 = vsel %vm254, 0.0, %v239
  %v259 = vsel %vm255, 0.0, %v247
  %v260 = vpack.c.bf16 %v229, %v228
  %v261 = vpack.c.bf16 %v231, %v230
  %v262 = vld [vmem:[%s4] sm:$0xf]
  %v263 = vld [vmem:[%s4 + $0x4] sm:$0xf]
  %v264 = vld [vmem:[%s4 + $0x8] sm:$0xf]
  %v265 = vld [vmem:[%s4 + $0xc] sm:$0xf]
  %v266 = vld [vmem:[%s4 + $0x10] sm:$0xf]
  %v267 = vld [vmem:[%s4 + $0x14] sm:$0xf]
  %v268 = vld [vmem:[%s4 + $0x18] sm:$0xf]
  %v269 = vld [vmem:[%s4 + $0x1c] sm:$0xf]
  %v270 = vld [vmem:[%s4 + $0x20] sm:$0xf]
  %v271 = vld [vmem:[%s4 + $0x24] sm:$0xf]
  %v272 = vld [vmem:[%s4 + $0x28] sm:$0xf]
  %v273 = vld [vmem:[%s4 + $0x2c] sm:$0xf]
  %v274 = vld [vmem:[%s4 + $0x30] sm:$0xf]
  %v275 = vld [vmem:[%s4 + $0x34] sm:$0xf]
  %v276 = vld [vmem:[%s4 + $0x38] sm:$0xf]
  %v277 = vld [vmem:[%s4 + $0x3c] sm:$0xf]
  %v278 = vpack.c.bf16 %v181, %v180
  %v279 = vpack.c.bf16 %v183, %v182
  %s280 = scalar_lea.vmem %s4, 64
  %v281 = vld [vmem:[%s280] sm:$0xf]
  %v282 = vld [vmem:[%s280 + $0x4] sm:$0xf]
  %v283 = vld [vmem:[%s280 + $0x8] sm:$0xf]
  %v284 = vld [vmem:[%s280 + $0xc] sm:$0xf]
  %v285 = vld [vmem:[%s280 + $0x10] sm:$0xf]
  %v286 = vld [vmem:[%s280 + $0x14] sm:$0xf]
  %v287 = vld [vmem:[%s280 + $0x18] sm:$0xf]
  %v288 = vld [vmem:[%s280 + $0x1c] sm:$0xf]
  %v289 = vld [vmem:[%s280 + $0x20] sm:$0xf]
  %v290 = vld [vmem:[%s280 + $0x24] sm:$0xf]
  %v291 = vld [vmem:[%s280 + $0x28] sm:$0xf]
  %v292 = vld [vmem:[%s280 + $0x2c] sm:$0xf]
  %v293 = vld [vmem:[%s280 + $0x30] sm:$0xf]
  %v294 = vld [vmem:[%s280 + $0x34] sm:$0xf]
  %v295 = vld [vmem:[%s280 + $0x38] sm:$0xf]
  %v296 = vld [vmem:[%s280 + $0x3c] sm:$0xf]
  %v313 = vunpack.c.l.b16 %v281
  %v314 = vunpack.c.l.b16 %v282
  %v315 = vunpack.c.l.b16 %v283
  %v316 = vunpack.c.l.b16 %v284
  %v317 = vunpack.c.l.b16 %v285
  %v318 = vunpack.c.l.b16 %v286
  %v319 = vunpack.c.l.b16 %v287
  %v320 = vunpack.c.l.b16 %v288
  %v321 = vunpack.c.l.b16 %v289
  %v322 = vunpack.c.l.b16 %v290
  %v323 = vunpack.c.l.b16 %v291
  %v324 = vunpack.c.l.b16 %v292
  %v325 = vunpack.c.l.b16 %v293
  %v326 = vunpack.c.l.b16 %v294
  %v327 = vunpack.c.l.b16 %v295
  %v328 = vunpack.c.l.b16 %v296
  %v329 = vpack.c.b16 %v314, %v313
  %v330 = vpack.c.b16 %v316, %v315
  %v331 = vpack.c.b16 %v318, %v317
  %v332 = vpack.c.b16 %v320, %v319
  %v333 = vpack.c.b16 %v322, %v321
  %v334 = vpack.c.b16 %v324, %v323
  %v335 = vpack.c.b16 %v326, %v325
  %v336 = vpack.c.b16 %v328, %v327
  %345 = vmatprep.subr.bf16.mxu0 0
  %346 = vmatpush1.bf16.msra.mxu0 %v329
  %347 = vmatprep.subr.bf16.mxu0 0
  %348 = vmatpush1.bf16.msra.mxu0 %v330
  %349 = vmatprep.subr.bf16.mxu0 0
  %350 = vmatpush1.bf16.msra.mxu0 %v331
  %351 = vmatprep.subr.bf16.mxu0 0
  %352 = vmatpush1.bf16.msra.mxu0 %v332
  %353 = vmatprep.subr.bf16.mxu0 0
  %354 = vmatpush1.bf16.msra.mxu0 %v333
  %355 = vmatprep.subr.bf16.mxu0 0
  %356 = vmatpush1.bf16.msra.mxu0 %v334
  %357 = vmatprep.subr.bf16.mxu0 0
  %358 = vmatpush1.bf16.msra.mxu0 %v335
  %359 = vmatprep.subr.bf16.mxu0 0
  %360 = vmatpush1.bf16.msra.mxu0 %v336
  %361 = vmatprep.subr.bf16.mxu0 0
  %362 = vmatpush1.bf16.msra.mxu0 0
  %363 = vmatprep.subr.bf16.mxu0 0
  %364 = vmatpush1.bf16.msra.mxu0 0
  %365 = vmatprep.subr.bf16.mxu0 0
  %366 = vmatpush1.bf16.msra.mxu0 0
  %367 = vmatprep.subr.bf16.mxu0 0
  %368 = vmatpush1.bf16.msra.mxu0 0
  %369 = vmatprep.subr.bf16.mxu0 0
  %370 = vmatpush1.bf16.msra.mxu0 0
  %371 = vmatprep.subr.bf16.mxu0 0
  %372 = vmatpush1.bf16.msra.mxu0 0
  %373 = vmatprep.subr.bf16.mxu0 0
  %374 = vmatpush1.bf16.msra.mxu0 0
  %375 = vmatprep.subr.bf16.mxu0 0
  %376 = vmatpush1.bf16.msra.mxu0 0
  %377 = vmatprep.mubr.bf16.mxu0 0
  %378 = vmatmul.mubr.bf16.gmra.mrb[0].mxu0 %v278
  %v379 = vpop.f32.mrb[0].mxu0
  %v380 = vadd.f32 0.0, %v379
  %v381 = vpop.f32.mrb[0].mxu0
  %v382 = vpop.f32.mrb[0].mxu0
  %v383 = vadd.f32 0.0, %v382
  %v384 = vpop.f32.mrb[0].mxu0
  %385 = vmatprep.mubr.bf16.mxu0 0
  %386 = vmatmul.mubr.bf16.gmra.mrb[0].mxu0 %v279
  %v387 = vpop.f32.mrb[0].mxu0
  %v388 = vadd.f32 0.0, %v387
  %v389 = vpop.f32.mrb[0].mxu0
  %v390 = vpop.f32.mrb[0].mxu0
  %v391 = vadd.f32 0.0, %v390
  %v392 = vpop.f32.mrb[0].mxu0
  %393 = vdwg.mxu0
  %v410 = vunpack.c.l.b16 %v262
  %v411 = vunpack.c.l.b16 %v263
  %v412 = vunpack.c.l.b16 %v264
  %v413 = vunpack.c.l.b16 %v265
  %v414 = vunpack.c.l.b16 %v266
  %v415 = vunpack.c.l.b16 %v267
  %v416 = vunpack.c.l.b16 %v268
  %v417 = vunpack.c.l.b16 %v269
  %v418 = vunpack.c.l.b16 %v270
  %v419 = vunpack.c.l.b16 %v271
  %v420 = vunpack.c.l.b16 %v272
  %v421 = vunpack.c.l.b16 %v273
  %v422 = vunpack.c.l.b16 %v274
  %v423 = vunpack.c.l.b16 %v275
  %v424 = vunpack.c.l.b16 %v276
  %v425 = vunpack.c.l.b16 %v277
  %v426 = vpack.c.b16 %v411, %v410
  %v427 = vpack.c.b16 %v413, %v412
  %v428 = vpack.c.b16 %v415, %v414
  %v429 = vpack.c.b16 %v417, %v416
  %v430 = vpack.c.b16 %v419, %v418
  %v431 = vpack.c.b16 %v421, %v420
  %v432 = vpack.c.b16 %v423, %v422
  %v433 = vpack.c.b16 %v425, %v424
  %442 = vmatprep.subr.bf16.mxu0 0
  %443 = vmatpush1.bf16.msra.mxu0 %v426
  %444 = vmatprep.subr.bf16.mxu0 0
  %445 = vmatpush1.bf16.msra.mxu0 %v427
  %446 = vmatprep.subr.bf16.mxu0 0
  %447 = vmatpush1.bf16.msra.mxu0 %v428
  %448 = vmatprep.subr.bf16.mxu0 0
  %449 = vmatpush1.bf16.msra.mxu0 %v429
  %450 = vmatprep.subr.bf16.mxu0 0
  %451 = vmatpush1.bf16.msra.mxu0 %v430
  %452 = vmatprep.subr.bf16.mxu0 0
  %453 = vmatpush1.bf16.msra.mxu0 %v431
  %454 = vmatprep.subr.bf16.mxu0 0
  %455 = vmatpush1.bf16.msra.mxu0 %v432
  %456 = vmatprep.subr.bf16.mxu0 0
  %457 = vmatpush1.bf16.msra.mxu0 %v433
  %458 = vmatprep.subr.bf16.mxu0 0
  %459 = vmatpush1.bf16.msra.mxu0 0
  %460 = vmatprep.subr.bf16.mxu0 0
  %461 = vmatpush1.bf16.msra.mxu0 0
  %462 = vmatprep.subr.bf16.mxu0 0
  %463 = vmatpush1.bf16.msra.mxu0 0
  %464 = vmatprep.subr.bf16.mxu0 0
  %465 = vmatpush1.bf16.msra.mxu0 0
  %466 = vmatprep.subr.bf16.mxu0 0
  %467 = vmatpush1.bf16.msra.mxu0 0
  %468 = vmatprep.subr.bf16.mxu0 0
  %469 = vmatpush1.bf16.msra.mxu0 0
  %470 = vmatprep.subr.bf16.mxu0 0
  %471 = vmatpush1.bf16.msra.mxu0 0
  %472 = vmatprep.subr.bf16.mxu0 0
  %473 = vmatpush1.bf16.msra.mxu0 0
  %474 = vmatprep.mubr.bf16.mxu0 0
  %475 = vmatmul.mubr.bf16.gmra.mrb[0].mxu0 %v260
  %v476 = vpop.f32.mrb[0].mxu0
  %v477 = vadd.f32 %v380, %v476
  %v478 = vpop.f32.mrb[0].mxu0
  %v479 = vpop.f32.mrb[0].mxu0
  %v480 = vadd.f32 %v383, %v479
  %v481 = vpop.f32.mrb[0].mxu0
  %482 = vmatprep.mubr.bf16.mxu0 0
  %483 = vmatmul.mubr.bf16.gmra.mrb[0].mxu0 %v261
  %v484 = vpop.f32.mrb[0].mxu0
  %v485 = vadd.f32 %v388, %v484
  %v486 = vpop.f32.mrb[0].mxu0
  %v487 = vpop.f32.mrb[0].mxu0
  %v488 = vadd.f32 %v391, %v487
  %v489 = vpop.f32.mrb[0].mxu0
  %490 = vdwg.mxu0
  %v491 = vpack.c.bf16 %v257, %v256
  %v492 = vpack.c.bf16 %v259, %v258
  %s493 = scalar_lea.vmem %s4, 128
  %v494 = vld [vmem:[%s493] sm:$0xf]
  %v495 = vld [vmem:[%s493 + $0x4] sm:$0xf]
  %v496 = vld [vmem:[%s493 + $0x8] sm:$0xf]
  %v497 = vld [vmem:[%s493 + $0xc] sm:$0xf]
  %v498 = vld [vmem:[%s493 + $0x10] sm:$0xf]
  %v499 = vld [vmem:[%s493 + $0x14] sm:$0xf]
  %v500 = vld [vmem:[%s493 + $0x18] sm:$0xf]
  %v501 = vld [vmem:[%s493 + $0x1c] sm:$0xf]
  %v502 = vld [vmem:[%s493 + $0x20] sm:$0xf]
  %v503 = vld [vmem:[%s493 + $0x24] sm:$0xf]
  %v504 = vld [vmem:[%s493 + $0x28] sm:$0xf]
  %v505 = vld [vmem:[%s493 + $0x2c] sm:$0xf]
  %v506 = vld [vmem:[%s493 + $0x30] sm:$0xf]
  %v507 = vld [vmem:[%s493 + $0x34] sm:$0xf]
  %v508 = vld [vmem:[%s493 + $0x38] sm:$0xf]
  %v509 = vld [vmem:[%s493 + $0x3c] sm:$0xf]
  %v526 = vunpack.c.l.b16 %v494
  %v527 = vunpack.c.l.b16 %v495
  %v528 = vunpack.c.l.b16 %v496
  %v529 = vunpack.c.l.b16 %v497
  %v530 = vunpack.c.l.b16 %v498
  %v531 = vunpack.c.l.b16 %v499
  %v532 = vunpack.c.l.b16 %v500
  %v533 = vunpack.c.l.b16 %v501
  %v534 = vunpack.c.l.b16 %v502
  %v535 = vunpack.c.l.b16 %v503
  %v536 = vunpack.c.l.b16 %v504
  %v537 = vunpack.c.l.b16 %v505
  %v538 = vunpack.c.l.b16 %v506
  %v539 = vunpack.c.l.b16 %v507
  %v540 = vunpack.c.l.b16 %v508
  %v541 = vunpack.c.l.b16 %v509
  %v542 = vpack.c.b16 %v527, %v526
  %v543 = vpack.c.b16 %v529, %v528
  %v544 = vpack.c.b16 %v531, %v530
  %v545 = vpack.c.b16 %v533, %v532
  %v546 = vpack.c.b16 %v535, %v534
  %v547 = vpack.c.b16 %v537, %v536
  %v548 = vpack.c.b16 %v539, %v538
  %v549 = vpack.c.b16 %v541, %v540
  %558 = vmatprep.subr.bf16.mxu0 0
  %559 = vmatpush1.bf16.msra.mxu0 %v542
  %560 = vmatprep.subr.bf16.mxu0 0
  %561 = vmatpush1.bf16.msra.mxu0 %v543
  %562 = vmatprep.subr.bf16.mxu0 0
  %563 = vmatpush1.bf16.msra.mxu0 %v544
  %564 = vmatprep.subr.bf16.mxu0 0
  %565 = vmatpush1.bf16.msra.mxu0 %v545
  %566 = vmatprep.subr.bf16.mxu0 0
  %567 = vmatpush1.bf16.msra.mxu0 %v546
  %568 = vmatprep.subr.bf16.mxu0 0
  %569 = vmatpush1.bf16.msra.mxu0 %v547
  %570 = vmatprep.subr.bf16.mxu0 0
  %571 = vmatpush1.bf16.msra.mxu0 %v548
  %572 = vmatprep.subr.bf16.mxu0 0
  %573 = vmatpush1.bf16.msra.mxu0 %v549
  %574 = vmatprep.subr.bf16.mxu0 0
  %575 = vmatpush1.bf16.msra.mxu0 0
  %576 = vmatprep.subr.bf16.mxu0 0
  %577 = vmatpush1.bf16.msra.mxu0 0
  %578 = vmatprep.subr.bf16.mxu0 0
  %579 = vmatpush1.bf16.msra.mxu0 0
  %580 = vmatprep.subr.bf16.mxu0 0
  %581 = vmatpush1.bf16.msra.mxu0 0
  %582 = vmatprep.subr.bf16.mxu0 0
  %583 = vmatpush1.bf16.msra.mxu0 0
  %584 = vmatprep.subr.bf16.mxu0 0
  %585 = vmatpush1.bf16.msra.mxu0 0
  %586 = vmatprep.subr.bf16.mxu0 0
  %587 = vmatpush1.bf16.msra.mxu0 0
  %588 = vmatprep.subr.bf16.mxu0 0
  %589 = vmatpush1.bf16.msra.mxu0 0
  %590 = vmatprep.mubr.bf16.mxu0 0
  %591 = vmatmul.mubr.bf16.gmra.mrb[0].mxu0 %v491
  %v592 = vpop.f32.mrb[0].mxu0
  %v593 = vadd.f32 0.0, %v592
  %v594 = vpop.f32.mrb[0].mxu0
  %v595 = vpop.f32.mrb[0].mxu0
  %v596 = vadd.f32 0.0, %v595
  %v597 = vpop.f32.mrb[0].mxu0
  %598 = vmatprep.mubr.bf16.mxu0 0
  %599 = vmatmul.mubr.bf16.gmra.mrb[0].mxu0 %v492
  %v600 = vpop.f32.mrb[0].mxu0
  %v601 = vadd.f32 0.0, %v600
  %v602 = vpop.f32.mrb[0].mxu0
  %v603 = vpop.f32.mrb[0].mxu0
  %v604 = vadd.f32 0.0, %v603
  %v605 = vpop.f32.mrb[0].mxu0
  %606 = vdwg.mxu0
  %v607 = vadd.f32 %v477, %v593
  %v608 = vadd.f32 %v480, %v596
  %v609 = vadd.f32 %v485, %v601
  %v610 = vadd.f32 %v488, %v604
  %v611 = vpack.c.bf16 %v608, %v607
  %v612 = vpack.c.bf16 %v610, %v609
  %v615 = vunpack.c.l.b16 %v611
  %v616 = vunpack.c.h.b16 %v611
  %v617 = vunpack.c.l.b16 %v612
  %v618 = vunpack.c.h.b16 %v612
  %v619 = vpack.c.b16 %v615, %v615
  %v620 = vpack.c.b16 %v616, %v616
  %v621 = vpack.c.b16 %v617, %v617
  %v622 = vpack.c.b16 %v618, %v618
  %627 = vst [vmem:[%s5] sm:$0xf] %v619
  %628 = vst [vmem:[%s5 + $0x4] sm:$0xf] %v620
  %629 = vst [vmem:[%s5 + $0x8] sm:$0xf] %v621
  %630 = vst [vmem:[%s5 + $0xc] sm:$0xf] %v622
  %v631 = vunpack.c.l.bf16 %v611
  %v632 = vunpack.c.h.bf16 %v611
  %v633 = vunpack.c.l.bf16 %v612
  %v634 = vunpack.c.h.bf16 %v612
  %v635 = vadd.f32 %v631, %v632
  %v636 = vadd.f32 %v635, %v633
  %v637 = vadd.f32 %v636, %v634
  %v638 = vrot.slane %v637, 4
  %v639 = vadd.f32 %v637, %v638
  %v640 = vrot.slane %v639, 2
  %v641 = vadd.f32 %v639, %v640
  %v642 = vrot.slane %v641, 1
  %v643 = vadd.f32 %v641, %v642
  %v644 = vmul.f32 %v631, %v631
  %v645 = vmul.f32 %v632, %v632
  %v646 = vmul.f32 %v633, %v633
  %v647 = vmul.f32 %v634, %v634
  %v648 = vadd.f32 %v644, %v645
  %v649 = vadd.f32 %v648, %v646
  %v650 = vadd.f32 %v649, %v647
  %v651 = vrot.slane %v650, 4
  %v652 = vadd.f32 %v650, %v651
  %v653 = vrot.slane %v652, 2
  %v654 = vadd.f32 %v652, %v653
  %v655 = vrot.slane %v654, 1
  %v656 = vadd.f32 %v654, %v655
  %v657 = vsel %vm207, %v643, %v656
  %vm658 = vcmask 1041408
  %v659 = vsel %vm658, %v657, 0.0
  %660 = vst [vmem:[%s6] sm:$0xff] %v659
  // Predicated region
  $region22: #{basic_block_forward.4} parent=0 // pred_check
    _
  $region23: #{basic_block_forward.4} parent=0 // pred_check_branch
    %662 = sbr.rel (0) target = $region25
  $region24: #{basic_block_forward.4} parent=0 // pred_region
    _
  $region25: #{basic_block_forward.4} parent=0 // pred_fallthru
    _
  // Predicated region
  $region26: #{basic_block_forward.4} parent=0 // pred_check
    _
  $region27: #{basic_block_forward.4} parent=0 // pred_check_branch
    %664 = sbr.rel (0) target = $region29
  $region28: #{basic_block_forward.4} parent=0 // pred_region
    _
  $region29: #{basic_block_forward.4} parent=0 // pred_fallthru
    _
  // Predicated region
  $region30: #{basic_block_forward.4} parent=0 // pred_check
    _
  $region31: #{basic_block_forward.4} parent=0 // pred_check_branch
    %666 = sbr.rel (0) target = $region33
  $region32: #{basic_block_forward.4} parent=0 // pred_region
    _
  $region33: #{basic_block_forward.4} parent=0 // pred_fallthru
    _
  // Predicated region
  $region34: #{basic_block_forward.4} parent=0 // pred_check
    _
  $region35: #{basic_block_forward.4} parent=0 // pred_check_branch
    %668 = sbr.rel (0) target = $region37
  $region36: #{basic_block_forward.4} parent=0 // pred_region
    _
  $region37: #{basic_block_forward.4} parent=0 // pred_fallthru
    _

// kernel: basic_block_forward.3
$region0: #{basic_block_forward.3}
  #allocation0 [shape = 'u32[]', space=smem, size = 0x4, offset = 0x4, fixed_abs, tag = 'smem constant byte address 0x4 - core index']
  #allocation1 [shape = 'u32[144,128]{1,0:T(1,128)}', space=vmem, size = 0x12000, scoped, tag = 'internal scratch']
  %s0 = inlined_call_operand.vmem [shape: f32[32,128], index: 0, kind: input, shape index: {}, may-alias: {0,1,2}]
  %s1 = inlined_call_operand.vmem [shape: f32[32,128], index: 1, kind: input, shape index: {}, may-alias: {0,1,2}]
  %s2 = inlined_call_operand.vmem [shape: f32[32,128], index: 2, kind: input, shape index: {}, may-alias: {0,1,2}]
  %s3 = inlined_call_operand.vmem [shape: bf16[3,128,128], index: 3, kind: input, shape index: {}]
  %s4 = inlined_call_operand.vmem [shape: bf16[32,128], index: 4, kind: output, shape index: {0}]
  %s5 = inlined_call_operand.vmem [shape: f32[8,128], index: 5, kind: output, shape index: {1}]
  %6 = xla_tuple %s4, %s5
  %s7 = sld [smem:[#allocation0]]
  $region34: #{basic_block_forward.3} parent=0
    _
  %s9 = ssub.s32 1, %s7
  %s10 = scalar_select 0, %s9, %s7
  // Predicated region
  $region2: #{basic_block_forward.3} parent=0 // pred_check
    _
  $region3: #{basic_block_forward.3} parent=0 // pred_check_branch
    %12 = sbr.rel (0) target = $region5
  $region4: #{basic_block_forward.3} parent=0 // pred_region
    _
  $region5: #{basic_block_forward.3} parent=0 // pred_fallthru
    _
  // Predicated region
  $region6: #{basic_block_forward.3} parent=0 // pred_check
    _
  $region7: #{basic_block_forward.3} parent=0 // pred_check_branch
    %14 = sbr.rel (0) target = $region9
  $region8: #{basic_block_forward.3} parent=0 // pred_region
    %s15 = smul.u32 0, 4
    %s16 = ssub.s32 %s15, 1
    %p17 = scmp.gt.s32.totalorder %s16, 0
    %s18 = scalar_select %p17, %s16, 0
    %p19 = scmp.lt.s32.totalorder %s18, 3
    %s20 = scalar_select %p19, %s18, 3
    %s21 = smul.addr %s20, 8
    %s22 = scalar_lea.vmem %s1, %s21
    %s23 = smul.u32 0, 4
    %s24 = ssub.s32 %s23, 1
    %p25 = scmp.gt.s32.totalorder %s24, 0
    %s26 = scalar_select %p25, %s24, 0
  $region9: #{basic_block_forward.3} parent=0 // pred_fallthru
    _
  // Predicated region
  $region10: #{basic_block_forward.3} parent=0 // pred_check
    _
  $region11: #{basic_block_forward.3} parent=0 // pred_check_branch
    %28 = sbr.rel (0) target = $region13
  $region12: #{basic_block_forward.3} parent=0 // pred_region
    %s29 = sadd.s32 0, 1
    %s30 = smul.u32 %s29, 4
    %p31 = scmp.lt.s32.totalorder %s30, 3
    %s32 = scalar_select %p31, %s30, 3
    %p33 = scmp.lt.s32.totalorder %s32, 3
    %s34 = scalar_select %p33, %s32, 3
    %s35 = smul.addr %s34, 8
    %s36 = scalar_lea.vmem %s2, %s35
    %s37 = sadd.s32 0, 1
    %s38 = smul.u32 %s37, 4
    %p39 = scmp.lt.s32.totalorder %s38, 3
    %s40 = scalar_select %p39, %s38, 3
  $region13: #{basic_block_forward.3} parent=0 // pred_fallthru
    _
  // Predicated region
  $region14: #{basic_block_forward.3} parent=0 // pred_check
    _
  $region15: #{basic_block_forward.3} parent=0 // pred_check_branch
    %42 = sbr.rel (0) target = $region17
  $region16: #{basic_block_forward.3} parent=0 // pred_region
    _
  $region17: #{basic_block_forward.3} parent=0 // pred_fallthru
    _
  %s43 = smul.u32 0, 4
  %s44 = ssub.s32 %s43, 1
  %p45 = scmp.gt.s32.totalorder %s44, 0
  %s46 = scalar_select %p45, %s44, 0
  %p47 = scmp.lt.s32.totalorder %s46, 3
  %s48 = scalar_select %p47, %s46, 3
  %s49 = smul.addr %s48, 8
  %s50 = scalar_lea.vmem %s1, %s49
  %s51 = sadd.s32 0, 1
  %s52 = smul.u32 %s51, 4
  %p53 = scmp.lt.s32.totalorder %s52, 3
  %s54 = scalar_select %p53, %s52, 3
  %p55 = scmp.lt.s32.totalorder %s54, 3
  %s56 = scalar_select %p55, %s54, 3
  %s57 = smul.addr %s56, 8
  %s58 = scalar_lea.vmem %s2, %s57
  %s59 = smul.u32 0, 4
  %s60 = ssub.s32 %s59, 1
  %p61 = scmp.gt.s32.totalorder %s60, 0
  %s62 = scalar_select %p61, %s60, 0
  %p63 = scmp.lt.s32.totalorder %s62, 3
  %s64 = scalar_select %p63, %s62, 3
  %s65 = smul.addr %s64, 8
  %s66 = scalar_lea.vmem %s1, %s65
  %s67 = smul.u32 0, 4
  %s68 = ssub.s32 %s67, 1
  %p69 = scmp.gt.s32.totalorder %s68, 0
  %s70 = scalar_select %p69, %s68, 0
  %s71 = sadd.s32 0, 1
  %s72 = smul.u32 %s71, 4
  %p73 = scmp.lt.s32.totalorder %s72, 3
  %s74 = scalar_select %p73, %s72, 3
  %p75 = scmp.lt.s32.totalorder %s74, 3
  %s76 = scalar_select %p75, %s74, 3
  %s77 = smul.addr %s76, 8
  %s78 = scalar_lea.vmem %s2, %s77
  %s79 = sadd.s32 0, 1
  %s80 = smul.u32 %s79, 4
  %p81 = scmp.lt.s32.totalorder %s80, 3
  %s82 = scalar_select %p81, %s80, 3
  %s84 = smul.u32 0, 32
  %v85 = vlaneseq
  %v86 = vshrl.u32 %v85, 7
  %v87 = vadd.s32 %v86, 8
  %v88 = vadd.s32 %v86, 16
  %v89 = vadd.s32 %v86, 24
  %v90 = vstv %s84
  %v91 = vadd.s32 %v90, %v86
  %v92 = vadd.s32 %v90, %v87
  %v93 = vadd.s32 %v90, %v88
  %v94 = vadd.s32 %v90, %v89
  %vm95 = vcmp.lt.s32.totalorder %v91, 0
  %v96 = vsub.s32 0, %v91
  %v97 = vsel %vm95, %v96, %v91
  %v98 = vshrl.u32 %v97, 4
  %v99 = vand.u32 %v97, 15
  %v100 = vsub.s32 0, %v99
  %v101 = vsel %vm95, %v100, %v99
  %vm102 = vcmp.lt.s32.totalorder %v92, 0
  %v103 = vsub.s32 0, %v92
  %v104 = vsel %vm102, %v103, %v92
  %v105 = vshrl.u32 %v104, 4
  %v106 = vand.u32 %v104, 15
  %v107 = vsub.s32 0, %v106
  %v108 = vsel %vm102, %v107, %v106
  %vm109 = vcmp.lt.s32.totalorder %v93, 0
  %v110 = vsub.s32 0, %v93
  %v111 = vsel %vm109, %v110, %v93
  %v112 = vshrl.u32 %v111, 4
  %v113 = vand.u32 %v111, 15
  %v114 = vsub.s32 0, %v113
  %v115 = vsel %vm109, %v114, %v113
  %vm116 = vcmp.lt.s32.totalorder %v94, 0
  %v117 = vsub.s32 0, %v94
  %v118 = vsel %vm116, %v117, %v94
  %v119 = vshrl.u32 %v118, 4
  %v120 = vand.u32 %v118, 15
  %v121 = vsub.s32 0, %v120
  %v122 = vsel %vm116, %v121, %v120
  %vm123 = vcmp.ne.s32.totalorder %v101, 0
  %vm124 = vcmp.ne.s32.totalorder %v108, 0
  %vm125 = vcmp.ne.s32.totalorder %v115, 0
  %vm126 = vcmp.ne.s32.totalorder %v122, 0
  %vm127 = vcmp.lt.s32.totalorder %v101, 0
  %vm128 = vcmp.lt.s32.totalorder %v108, 0
  %vm129 = vcmp.lt.s32.totalorder %v115, 0
  %vm130 = vcmp.lt.s32.totalorder %v122, 0
  %vm131 = vmand %vm127, %vm123
  %vm132 = vmand %vm128, %vm124
  %vm133 = vmand %vm129, %vm125
  %vm134 = vmand %vm130, %vm126
  %v135 = vadd.s32 %v101, 16
  %v136 = vadd.s32 %v108, 16
  %v137 = vadd.s32 %v115, 16
  %v138 = vadd.s32 %v122, 16
  %v139 = vsel %vm131, %v135, %v101
  %v140 = vsel %vm132, %v136, %v108
  %v141 = vsel %vm133, %v137, %v115
  %v142 = vsel %vm134, %v138, %v122
  %vm143 = vcmp.eq.s32.totalorder %v139, 0
  %vm144 = vcmp.eq.s32.totalorder %v140, 0
  %vm145 = vcmp.eq.s32.totalorder %v141, 0
  %vm146 = vcmp.eq.s32.totalorder %v142, 0
  %vm147 = vcmp.eq.s32.totalorder %v139, 15
  %vm148 = vcmp.eq.s32.totalorder %v140, 15
  %vm149 = vcmp.eq.s32.totalorder %v141, 15
  %vm150 = vcmp.eq.s32.totalorder %v142, 15
  %v151 = vld [vmem:[%s0] sm:$0xff]
  %v152 = vld [vmem:[%s0 + $0x8] sm:$0xff]
  %v153 = vld [vmem:[%s0 + $0x10] sm:$0xff]
  %v154 = vld [vmem:[%s0 + $0x18] sm:$0xff]
  %v155 = vld [vmem:[%s66 + $0x7] sm:$0x1]
  %v156 = vld [vmem:[%s78] sm:$0x1]
  %vm161 = vcmask 1040384
  %v162 = vrot.slane %v151, 7
  %v163 = vrot.slane %v152, 7
  %v164 = vsel %vm161, %v162, %v163
  %v165 = vrot.slane %v153, 7
  %v166 = vsel %vm161, %v163, %v165
  %v167 = vrot.slane %v154, 7
  %v168 = vsel %vm161, %v165, %v167
  %v173 = vsel %vm161, %v155, %v162
  %v174 = vsel %vm143, 1, 0
  %v175 = vsel %vm144, 1, 0
  %v176 = vsel %vm145, 1, 0
  %v177 = vsel %vm146, 1, 0
  %vm178 = vcmp.eq.s32.totalorder %v174, 1
  %vm179 = vcmp.eq.s32.totalorder %v175, 1
  %vm180 = vcmp.eq.s32.totalorder %v176, 1
  %vm181 = vcmp.eq.s32.totalorder %v177, 1
  %v182 = vsel %vm178, 0.0, %v173
  %v183 = vsel %vm179, 0.0, %v164
  %v184 = vsel %vm180, 0.0, %v166
  %v185 = vsel %vm181, 0.0, %v168
  %vm186 = vcmask 1046528
  %v187 = vrot.slane %v151, 1
  %v188 = vrot.slane %v152, 1
  %v189 = vsel %vm186, %v187, %v188
  %v190 = vrot.slane %v153, 1
  %v191 = vsel %vm186, %v188, %v190
  %v192 = vrot.slane %v154, 1
  %v193 = vsel %vm186, %v190, %v192
  %v199 = vrot.slane %v156, 1
  %v201 = vsel %vm186, %v192, %v199
  %v202 = vsel %vm147, 1, 0
  %v203 = vsel %vm148, 1, 0
  %v204 = vsel %vm149, 1, 0
  %v205 = vsel %vm150, 1, 0
  %vm206 = vcmp.eq.s32.totalorder %v202, 1
  %vm207 = vcmp.eq.s32.totalorder %v203, 1
  %vm208 = vcmp.eq.s32.totalorder %v204, 1
  %vm209 = vcmp.eq.s32.totalorder %v205, 1
  %v210 = vsel %vm206, 0.0, %v189
  %v211 = vsel %vm207, 0.0, %v191
  %v212 = vsel %vm208, 0.0, %v193
  %v213 = vsel %vm209, 0.0, %v201
  %v214 = vpack.c.bf16 %v183, %v182
  %v215 = vpack.c.bf16 %v185, %v184
  %v216 = vld [vmem:[%s3] sm:$0xf]
  %v217 = vld [vmem:[%s3 + $0x4] sm:$0xf]
  %v218 = vld [vmem:[%s3 + $0x8] sm:$0xf]
  %v219 = vld [vmem:[%s3 + $0xc] sm:$0xf]
  %v220 = vld [vmem:[%s3 + $0x10] sm:$0xf]
  %v221 = vld [vmem:[%s3 + $0x14] sm:$0xf]
  %v222 = vld [vmem:[%s3 + $0x18] sm:$0xf]
  %v223 = vld [vmem:[%s3 + $0x1c] sm:$0xf]
  %v224 = vld [vmem:[%s3 + $0x20] sm:$0xf]
  %v225 = vld [vmem:[%s3 + $0x24] sm:$0xf]
  %v226 = vld [vmem:[%s3 + $0x28] sm:$0xf]
  %v227 = vld [vmem:[%s3 + $0x2c] sm:$0xf]
  %v228 = vld [vmem:[%s3 + $0x30] sm:$0xf]
  %v229 = vld [vmem:[%s3 + $0x34] sm:$0xf]
  %v230 = vld [vmem:[%s3 + $0x38] sm:$0xf]
  %v231 = vld [vmem:[%s3 + $0x3c] sm:$0xf]
  %v232 = vpack.c.bf16 %v152, %v151
  %v233 = vpack.c.bf16 %v154, %v153
  %s234 = scalar_lea.vmem %s3, 64
  %v235 = vld [vmem:[%s234] sm:$0xf]
  %v236 = vld [vmem:[%s234 + $0x4] sm:$0xf]
  %v237 = vld [vmem:[%s234 + $0x8] sm:$0xf]
  %v238 = vld [vmem:[%s234 + $0xc] sm:$0xf]
  %v239 = vld [vmem:[%s234 + $0x10] sm:$0xf]
  %v240 = vld [vmem:[%s234 + $0x14] sm:$0xf]
  %v241 = vld [vmem:[%s234 + $0x18] sm:$0xf]
  %v242 = vld [vmem:[%s234 + $0x1c] sm:$0xf]
  %v243 = vld [vmem:[%s234 + $0x20] sm:$0xf]
  %v244 = vld [vmem:[%s234 + $0x24] sm:$0xf]
  %v245 = vld [vmem:[%s234 + $0x28] sm:$0xf]
  %v246 = vld [vmem:[%s234 + $0x2c] sm:$0xf]
  %v247 = vld [vmem:[%s234 + $0x30] sm:$0xf]
  %v248 = vld [vmem:[%s234 + $0x34] sm:$0xf]
  %v249 = vld [vmem:[%s234 + $0x38] sm:$0xf]
  %v250 = vld [vmem:[%s234 + $0x3c] sm:$0xf]
  %v267 = vunpack.c.l.b16 %v235
  %v268 = vunpack.c.l.b16 %v236
  %v269 = vunpack.c.l.b16 %v237
  %v270 = vunpack.c.l.b16 %v238
  %v271 = vunpack.c.l.b16 %v239
  %v272 = vunpack.c.l.b16 %v240
  %v273 = vunpack.c.l.b16 %v241
  %v274 = vunpack.c.l.b16 %v242
  %v275 = vunpack.c.l.b16 %v243
  %v276 = vunpack.c.l.b16 %v244
  %v277 = vunpack.c.l.b16 %v245
  %v278 = vunpack.c.l.b16 %v246
  %v279 = vunpack.c.l.b16 %v247
  %v280 = vunpack.c.l.b16 %v248
  %v281 = vunpack.c.l.b16 %v249
  %v282 = vunpack.c.l.b16 %v250
  %v283 = vpack.c.b16 %v268, %v267
  %v284 = vpack.c.b16 %v270, %v269
  %v285 = vpack.c.b16 %v272, %v271
  %v286 = vpack.c.b16 %v274, %v273
  %v287 = vpack.c.b16 %v276, %v275
  %v288 = vpack.c.b16 %v278, %v277
  %v289 = vpack.c.b16 %v280, %v279
  %v290 = vpack.c.b16 %v282, %v281
  %299 = vmatprep.subr.bf16.mxu0 0
  %300 = vmatpush1.bf16.msra.mxu0 %v283
  %301 = vmatprep.subr.bf16.mxu0 0
  %302 = vmatpush1.bf16.msra.mxu0 %v284
  %303 = vmatprep.subr.bf16.mxu0 0
  %304 = vmatpush1.bf16.msra.mxu0 %v285
  %305 = vmatprep.subr.bf16.mxu0 0
  %306 = vmatpush1.bf16.msra.mxu0 %v286
  %307 = vmatprep.subr.bf16.mxu0 0
  %308 = vmatpush1.bf16.msra.mxu0 %v287
  %309 = vmatprep.subr.bf16.mxu0 0
  %310 = vmatpush1.bf16.msra.mxu0 %v288
  %311 = vmatprep.subr.bf16.mxu0 0
  %312 = vmatpush1.bf16.msra.mxu0 %v289
  %313 = vmatprep.subr.bf16.mxu0 0
  %314 = vmatpush1.bf16.msra.mxu0 %v290
  %315 = vmatprep.subr.bf16.mxu0 0
  %316 = vmatpush1.bf16.msra.mxu0 0
  %317 = vmatprep.subr.bf16.mxu0 0
  %318 = vmatpush1.bf16.msra.mxu0 0
  %319 = vmatprep.subr.bf16.mxu0 0
  %320 = vmatpush1.bf16.msra.mxu0 0
  %321 = vmatprep.subr.bf16.mxu0 0
  %322 = vmatpush1.bf16.msra.mxu0 0
  %323 = vmatprep.subr.bf16.mxu0 0
  %324 = vmatpush1.bf16.msra.mxu0 0
  %325 = vmatprep.subr.bf16.mxu0 0
  %326 = vmatpush1.bf16.msra.mxu0 0
  %327 = vmatprep.subr.bf16.mxu0 0
  %328 = vmatpush1.bf16.msra.mxu0 0
  %329 = vmatprep.subr.bf16.mxu0 0
  %330 = vmatpush1.bf16.msra.mxu0 0
  %331 = vmatprep.mubr.bf16.mxu0 0
  %332 = vmatmul.mubr.bf16.gmra.mrb[0].mxu0 %v232
  %v333 = vpop.f32.mrb[0].mxu0
  %v334 = vadd.f32 0.0, %v333
  %v335 = vpop.f32.mrb[0].mxu0
  %v336 = vpop.f32.mrb[0].mxu0
  %v337 = vadd.f32 0.0, %v336
  %v338 = vpop.f32.mrb[0].mxu0
  %339 = vmatprep.mubr.bf16.mxu0 0
  %340 = vmatmul.mubr.bf16.gmra.mrb[0].mxu0 %v233
  %v341 = vpop.f32.mrb[0].mxu0
  %v342 = vadd.f32 0.0, %v341
  %v343 = vpop.f32.mrb[0].mxu0
  %v344 = vpop.f32.mrb[0].mxu0
  %v345 = vadd.f32 0.0, %v344
  %v346 = vpop.f32.mrb[0].mxu0
  %347 = vdwg.mxu0
  %v364 = vunpack.c.l.b16 %v216
  %v365 = vunpack.c.l.b16 %v217
  %v366 = vunpack.c.l.b16 %v218
  %v367 = vunpack.c.l.b16 %v219
  %v368 = vunpack.c.l.b16 %v220
  %v369 = vunpack.c.l.b16 %v221
  %v370 = vunpack.c.l.b16 %v222
  %v371 = vunpack.c.l.b16 %v223
  %v372 = vunpack.c.l.b16 %v224
  %v373 = vunpack.c.l.b16 %v225
  %v374 = vunpack.c.l.b16 %v226
  %v375 = vunpack.c.l.b16 %v227
  %v376 = vunpack.c.l.b16 %v228
  %v377 = vunpack.c.l.b16 %v229
  %v378 = vunpack.c.l.b16 %v230
  %v379 = vunpack.c.l.b16 %v231
  %v380 = vpack.c.b16 %v365, %v364
  %v381 = vpack.c.b16 %v367, %v366
  %v382 = vpack.c.b16 %v369, %v368
  %v383 = vpack.c.b16 %v371, %v370
  %v384 = vpack.c.b16 %v373, %v372
  %v385 = vpack.c.b16 %v375, %v374
  %v386 = vpack.c.b16 %v377, %v376
  %v387 = vpack.c.b16 %v379, %v378
  %396 = vmatprep.subr.bf16.mxu0 0
  %397 = vmatpush1.bf16.msra.mxu0 %v380
  %398 = vmatprep.subr.bf16.mxu0 0
  %399 = vmatpush1.bf16.msra.mxu0 %v381
  %400 = vmatprep.subr.bf16.mxu0 0
  %401 = vmatpush1.bf16.msra.mxu0 %v382
  %402 = vmatprep.subr.bf16.mxu0 0
  %403 = vmatpush1.bf16.msra.mxu0 %v383
  %404 = vmatprep.subr.bf16.mxu0 0
  %405 = vmatpush1.bf16.msra.mxu0 %v384
  %406 = vmatprep.subr.bf16.mxu0 0
  %407 = vmatpush1.bf16.msra.mxu0 %v385
  %408 = vmatprep.subr.bf16.mxu0 0
  %409 = vmatpush1.bf16.msra.mxu0 %v386
  %410 = vmatprep.subr.bf16.mxu0 0
  %411 = vmatpush1.bf16.msra.mxu0 %v387
  %412 = vmatprep.subr.bf16.mxu0 0
  %413 = vmatpush1.bf16.msra.mxu0 0
  %414 = vmatprep.subr.bf16.mxu0 0
  %415 = vmatpush1.bf16.msra.mxu0 0
  %416 = vmatprep.subr.bf16.mxu0 0
  %417 = vmatpush1.bf16.msra.mxu0 0
  %418 = vmatprep.subr.bf16.mxu0 0
  %419 = vmatpush1.bf16.msra.mxu0 0
  %420 = vmatprep.subr.bf16.mxu0 0
  %421 = vmatpush1.bf16.msra.mxu0 0
  %422 = vmatprep.subr.bf16.mxu0 0
  %423 = vmatpush1.bf16.msra.mxu0 0
  %424 = vmatprep.subr.bf16.mxu0 0
  %425 = vmatpush1.bf16.msra.mxu0 0
  %426 = vmatprep.subr.bf16.mxu0 0
  %427 = vmatpush1.bf16.msra.mxu0 0
  %428 = vmatprep.mubr.bf16.mxu0 0
  %429 = vmatmul.mubr.bf16.gmra.mrb[0].mxu0 %v214
  %v430 = vpop.f32.mrb[0].mxu0
  %v431 = vadd.f32 %v334, %v430
  %v432 = vpop.f32.mrb[0].mxu0
  %v433 = vpop.f32.mrb[0].mxu0
  %v434 = vadd.f32 %v337, %v433
  %v435 = vpop.f32.mrb[0].mxu0
  %436 = vmatprep.mubr.bf16.mxu0 0
  %437 = vmatmul.mubr.bf16.gmra.mrb[0].mxu0 %v215
  %v438 = vpop.f32.mrb[0].mxu0
  %v439 = vadd.f32 %v342, %v438
  %v440 = vpop.f32.mrb[0].mxu0
  %v441 = vpop.f32.mrb[0].mxu0
  %v442 = vadd.f32 %v345, %v441
  %v443 = vpop.f32.mrb[0].mxu0
  %444 = vdwg.mxu0
  %v445 = vpack.c.bf16 %v211, %v210
  %v446 = vpack.c.bf16 %v213, %v212
  %s447 = scalar_lea.vmem %s3, 128
  %v448 = vld [vmem:[%s447] sm:$0xf]
  %v449 = vld [vmem:[%s447 + $0x4] sm:$0xf]
  %v450 = vld [vmem:[%s447 + $0x8] sm:$0xf]
  %v451 = vld [vmem:[%s447 + $0xc] sm:$0xf]
  %v452 = vld [vmem:[%s447 + $0x10] sm:$0xf]
  %v453 = vld [vmem:[%s447 + $0x14] sm:$0xf]
  %v454 = vld [vmem:[%s447 + $0x18] sm:$0xf]
  %v455 = vld [vmem:[%s447 + $0x1c] sm:$0xf]
  %v456 = vld [vmem:[%s447 + $0x20] sm:$0xf]
  %v457 = vld [vmem:[%s447 + $0x24] sm:$0xf]
  %v458 = vld [vmem:[%s447 + $0x28] sm:$0xf]
  %v459 = vld [vmem:[%s447 + $0x2c] sm:$0xf]
  %v460 = vld [vmem:[%s447 + $0x30] sm:$0xf]
  %v461 = vld [vmem:[%s447 + $0x34] sm:$0xf]
  %v462 = vld [vmem:[%s447 + $0x38] sm:$0xf]
  %v463 = vld [vmem:[%s447 + $0x3c] sm:$0xf]
  %v480 = vunpack.c.l.b16 %v448
  %v481 = vunpack.c.l.b16 %v449
  %v482 = vunpack.c.l.b16 %v450
  %v483 = vunpack.c.l.b16 %v451
  %v484 = vunpack.c.l.b16 %v452
  %v485 = vunpack.c.l.b16 %v453
  %v486 = vunpack.c.l.b16 %v454
  %v487 = vunpack.c.l.b16 %v455
  %v488 = vunpack.c.l.b16 %v456
  %v489 = vunpack.c.l.b16 %v457
  %v490 = vunpack.c.l.b16 %v458
  %v491 = vunpack.c.l.b16 %v459
  %v492 = vunpack.c.l.b16 %v460
  %v493 = vunpack.c.l.b16 %v461
  %v494 = vunpack.c.l.b16 %v462
  %v495 = vunpack.c.l.b16 %v463
  %v496 = vpack.c.b16 %v481, %v480
  %v497 = vpack.c.b16 %v483, %v482
  %v498 = vpack.c.b16 %v485, %v484
  %v499 = vpack.c.b16 %v487, %v486
  %v500 = vpack.c.b16 %v489, %v488
  %v501 = vpack.c.b16 %v491, %v490
  %v502 = vpack.c.b16 %v493, %v492
  %v503 = vpack.c.b16 %v495, %v494
  %512 = vmatprep.subr.bf16.mxu0 0
  %513 = vmatpush1.bf16.msra.mxu0 %v496
  %514 = vmatprep.subr.bf16.mxu0 0
  %515 = vmatpush1.bf16.msra.mxu0 %v497
  %516 = vmatprep.subr.bf16.mxu0 0
  %517 = vmatpush1.bf16.msra.mxu0 %v498
  %518 = vmatprep.subr.bf16.mxu0 0
  %519 = vmatpush1.bf16.msra.mxu0 %v499
  %520 = vmatprep.subr.bf16.mxu0 0
  %521 = vmatpush1.bf16.msra.mxu0 %v500
  %522 = vmatprep.subr.bf16.mxu0 0
  %523 = vmatpush1.bf16.msra.mxu0 %v501
  %524 = vmatprep.subr.bf16.mxu0 0
  %525 = vmatpush1.bf16.msra.mxu0 %v502
  %526 = vmatprep.subr.bf16.mxu0 0
  %527 = vmatpush1.bf16.msra.mxu0 %v503
  %528 = vmatprep.subr.bf16.mxu0 0
  %529 = vmatpush1.bf16.msra.mxu0 0
  %530 = vmatprep.subr.bf16.mxu0 0
  %531 = vmatpush1.bf16.msra.mxu0 0
  %532 = vmatprep.subr.bf16.mxu0 0
  %533 = vmatpush1.bf16.msra.mxu0 0
  %534 = vmatprep.subr.bf16.mxu0 0
  %535 = vmatpush1.bf16.msra.mxu0 0
  %536 = vmatprep.subr.bf16.mxu0 0
  %537 = vmatpush1.bf16.msra.mxu0 0
  %538 = vmatprep.subr.bf16.mxu0 0
  %539 = vmatpush1.bf16.msra.mxu0 0
  %540 = vmatprep.subr.bf16.mxu0 0
  %541 = vmatpush1.bf16.msra.mxu0 0
  %542 = vmatprep.subr.bf16.mxu0 0
  %543 = vmatpush1.bf16.msra.mxu0 0
  %544 = vmatprep.mubr.bf16.mxu0 0
  %545 = vmatmul.mubr.bf16.gmra.mrb[0].mxu0 %v445
  %v546 = vpop.f32.mrb[0].mxu0
  %v547 = vadd.f32 0.0, %v546
  %v548 = vpop.f32.mrb[0].mxu0
  %v549 = vpop.f32.mrb[0].mxu0
  %v550 = vadd.f32 0.0, %v549
  %v551 = vpop.f32.mrb[0].mxu0
  %552 = vmatprep.mubr.bf16.mxu0 0
  %553 = vmatmul.mubr.bf16.gmra.mrb[0].mxu0 %v446
  %v554 = vpop.f32.mrb[0].mxu0
  %v555 = vadd.f32 0.0, %v554
  %v556 = vpop.f32.mrb[0].mxu0
  %v557 = vpop.f32.mrb[0].mxu0
  %v558 = vadd.f32 0.0, %v557
  %v559 = vpop.f32.mrb[0].mxu0
  %560 = vdwg.mxu0
  %v561 = vadd.f32 %v431, %v547
  %v562 = vadd.f32 %v434, %v550
  %v563 = vadd.f32 %v439, %v555
  %v564 = vadd.f32 %v442, %v558
  %v565 = vpack.c.bf16 %v562, %v561
  %v566 = vpack.c.bf16 %v564, %v563
  %v569 = vunpack.c.l.b16 %v565
  %v570 = vunpack.c.h.b16 %v565
  %v571 = vunpack.c.l.b16 %v566
  %v572 = vunpack.c.h.b16 %v566
  %v573 = vpack.c.b16 %v569, %v569
  %v574 = vpack.c.b16 %v570, %v570
  %v575 = vpack.c.b16 %v571, %v571
  %v576 = vpack.c.b16 %v572, %v572
  %581 = vst [vmem:[%s4] sm:$0xf] %v573
  %582 = vst [vmem:[%s4 + $0x4] sm:$0xf] %v574
  %583 = vst [vmem:[%s4 + $0x8] sm:$0xf] %v575
  %584 = vst [vmem:[%s4 + $0xc] sm:$0xf] %v576
  %v585 = vunpack.c.l.bf16 %v565
  %v586 = vunpack.c.h.bf16 %v565
  %v587 = vunpack.c.l.bf16 %v566
  %v588 = vunpack.c.h.bf16 %v566
  %v589 = vadd.f32 %v585, %v586
  %v590 = vadd.f32 %v589, %v587
  %v591 = vadd.f32 %v590, %v588
  %v592 = vrot.slane %v591, 4
  %v593 = vadd.f32 %v591, %v592
  %v594 = vrot.slane %v593, 2
  %v595 = vadd.f32 %v593, %v594
  %v596 = vrot.slane %v595, 1
  %v597 = vadd.f32 %v595, %v596
  %v598 = vmul.f32 %v585, %v585
  %v599 = vmul.f32 %v586, %v586
  %v600 = vmul.f32 %v587, %v587
  %v601 = vmul.f32 %v588, %v588
  %v602 = vadd.f32 %v598, %v599
  %v603 = vadd.f32 %v602, %v600
  %v604 = vadd.f32 %v603, %v601
  %v605 = vrot.slane %v604, 4
  %v606 = vadd.f32 %v604, %v605
  %v607 = vrot.slane %v606, 2
  %v608 = vadd.f32 %v606, %v607
  %v609 = vrot.slane %v608, 1
  %v610 = vadd.f32 %v608, %v609
  %v611 = vsel %vm161, %v597, %v610
  %vm612 = vcmask 1041408
  %v613 = vsel %vm612, %v611, 0.0
  %614 = vst [vmem:[%s5] sm:$0xff] %v613
  // Predicated region
  $region18: #{basic_block_forward.3} parent=0 // pred_check
    _
  $region19: #{basic_block_forward.3} parent=0 // pred_check_branch
    %616 = sbr.rel (0) target = $region21
  $region20: #{basic_block_forward.3} parent=0 // pred_region
    _
  $region21: #{basic_block_forward.3} parent=0 // pred_fallthru
    _
  // Predicated region
  $region22: #{basic_block_forward.3} parent=0 // pred_check
    _
  $region23: #{basic_block_forward.3} parent=0 // pred_check_branch
    %618 = sbr.rel (0) target = $region25
  $region24: #{basic_block_forward.3} parent=0 // pred_region
    _
  $region25: #{basic_block_forward.3} parent=0 // pred_fallthru
    _
  // Predicated region
  $region26: #{basic_block_forward.3} parent=0 // pred_check
    _
  $region27: #{basic_block_forward.3} parent=0 // pred_check_branch
    %620 = sbr.rel (0) target = $region29
  $region28: #{basic_block_forward.3} parent=0 // pred_region
    _
  $region29: #{basic_block_forward.3} parent=0 // pred_fallthru
    _
  // Predicated region
  $region30: #{basic_block_forward.3} parent=0 // pred_check
    _
  $region31: #{basic_block_forward.3} parent=0 // pred_check_branch
    %622 = sbr.rel (0) target = $region33
  $region32: #{basic_block_forward.3} parent=0 // pred_region
    _
  $region33: #{basic_block_forward.3} parent=0 // pred_fallthru
    _

</llo_original>
